<compile_context>
chip_gen: v7x
topology: tpu7x:2x2x1
jax: 0.10.0
libtpu: 0.0.40
codegen_flags: <defaults>
</compile_context>

<pallas_src>
import jax
import jax.numpy as jnp
from jax.experimental import pallas as pl
from jax.experimental.pallas import tpu as pltpu


def _lstm_decoder_kernel(targets_ref, slab_ref, hc_ref, loss_ref, out_ref):
    B, T = targets_ref.shape          # targets pre-transposed AND pre-shifted by -bout: (B, T)
    H = hc_ref.shape[-1]
    G = 4 * H

    # Slab layout (width 8H, every section 8-sublane aligned, requires H % 8 == 0):
    #   row 0, lanes [0:4H) : b00  = prep(b_ih0 + b_hh0)                (step-0 layer-0 bias)
    #   row 1, lanes [0:4H) : b0p  = prep(b_ih0 + b_hh0 + bout*W_ih0^T) (steps >= 1)
    #   row 2, lanes [0:4H) : b1   = prep(b_ih1 + b_hh1)
    #   row 3, lanes [0:H)  : out.weight row
    #   rows 4..7           : zero padding
    #   rows 8      .. 8+H  : W_q  = [prep(W_ih1^T) | prep(W_hh0^T)]    (H, 8H)
    #   rows 8+H    .. 8+2H : W_pb = [prep(W_fb)    | prep(W_hh1^T)]    (H, 8H)
    # where prep() = permute gate columns (i,f,g,o)->(f,i,g,o) and scale g cols by 2,
    # and W_fb = wout^T ⊗ W_ih0^T is the rank-1 feedback fold of the Linear head.

    # Hoisted loads + broadcasts (JAX does not CSE broadcast_in_dim -> do them once).
    b00_b  = jnp.broadcast_to(slab_ref[0:1, 0:G], (B, G))
    b0p_b  = jnp.broadcast_to(slab_ref[1:2, 0:G], (B, G))
    b1_b   = jnp.broadcast_to(slab_ref[2:3, 0:G], (B, G))
    wout_b = jnp.broadcast_to(slab_ref[3:4, 0:H], (B, H))
    wq     = slab_ref[8:8 + H, :]                 # (H, 8H)
    wpb    = slab_ref[8 + H:8 + 2 * H, :]         # (H, 8H)

    def cell(gates, c):
        # Single full-vreg EUP push (sigmoid); tanh(g) recovered with a VPU fma
        # because the g columns were pre-scaled by 2 in the wrapper.
        sig = jax.nn.sigmoid(gates)
        f = sig[:, 0:H]                 # f first -> lane-aligned with c
        i = sig[:, H:2 * H]
        g = 2.0 * sig[:, 2 * H:3 * H] - 1.0
        o = sig[:, 3 * H:4 * H]
        c_new = f * c + i * g
        h_new = o * jnp.tanh(c_new)
        return h_new, c_new

    def body(prev0, prev1, c0, c1):
        # prev0: fully-formed gates0(t) (incl. bias); prev1: h_l1(t-1) @ W_hh1^T.
        h0n, c0n = cell(prev0, c0)
        q = jnp.dot(h0n, wq, preferred_element_type=jnp.float32)       # issued right after cell 0
        gates1 = q[:, 0:G] + prev1 + b1_b
        h1n, c1n = cell(gates1, c1)
        pb = jnp.dot(h1n, wpb, preferred_element_type=jnp.float32)     # issued right after cell 1
        pred_nb = jnp.sum(h1n * wout_b, axis=-1, keepdims=True)        # off-chain (loss/output only)
        return q, pb, c0n, c1n, pred_nb

    # Priming matmuls from the initial hidden state (only the lanes we need are used).
    q  = jnp.dot(hc_ref[0], wq,  preferred_element_type=jnp.float32)   # h_l0(init) @ W_q
    pb = jnp.dot(hc_ref[1], wpb, preferred_element_type=jnp.float32)   # h_l1(init) @ W_pb
    c_l0 = hc_ref[2]
    c_l1 = hc_ref[3]

    # Step 0: x = 0 -> no feedback term (pb[:, 0:G]) and no bout in the bias.
    prev0 = q[:, G:2 * G] + b00_b
    prev1 = pb[:, G:2 * G]
    q, pb, c_l0, c_l1, pred_nb = body(prev0, prev1, c_l0, c_l1)
    preds = [pred_nb]

    # Steps 1..T-1: gates0 is entirely assembled from the previous step's q/pb.
    for _ in range(1, T):           # T is static & small -> fully unrolled
        prev0 = q[:, G:2 * G] + pb[:, 0:G] + b0p_b
        prev1 = pb[:, G:2 * G]
        q, pb, c_l0, c_l1, pred_nb = body(prev0, prev1, c_l0, c_l1)
        preds.append(pred_nb)

    # Deferred loss epilogue: targets were pre-shifted by -bout in the wrapper, so
    # (pred - target) == (pred_nb - targets_shift). One vectorized reduce at the end.
    preds_cat = jnp.concatenate(preds, axis=1)                          # (B, T)
    err = preds_cat - targets_ref[...]
    loss_ref[...] = jnp.sum(err * err, keepdims=True) * (1.0 / B)       # sum_t mean_b
    out_ref[...] = pred_nb                                              # bias added in wrapper


def decoder_forward(targets, hidden, params):
    """targets: (num_steps, batch) f32; hidden: (h0, c0) each (num_layers, batch, H)."""
    h0, c0 = hidden
    T, B = targets.shape
    H = h0.shape[-1]
    assert H % 8 == 0, "slab sections assume sublane-aligned H (H % 8 == 0)"
    G = 4 * H
    f32 = jnp.float32
    (wih0, whh0, bih0, bhh0, wih1, whh1, bih1, bhh1, wout, bout) = params

    def prep(m):
        # Gate-dim (last axis = 4H, PyTorch order i,f,g,o) -> reorder to (f,i,g,o)
        # so f*c is lane-aligned, and pre-scale the g block by 2 so the kernel can
        # use tanh(z) = 2*sigmoid(2z) - 1 (drops one EUP push per cell).
        m = m.astype(f32)
        i, fg, g, o = m[..., 0:H], m[..., H:2 * H], m[..., 2 * H:3 * H], m[..., 3 * H:4 * H]
        return jnp.concatenate([fg, i, 2.0 * g, o], axis=-1)

    wih0_row = wih0.reshape(G).astype(f32)           # W_ih0^T as a (4H,) row
    wout_row = wout.reshape(H).astype(f32)
    bout_s = bout.reshape(()).astype(f32)

    w_fb = jnp.outer(wout_row, wih0_row)             # (H, 4H) rank-1 feedback fold of the head
    b00 = prep(bih0 + bhh0)                          # step 0: x = 0, no bout term
    b0p = prep(bih0 + bhh0 + bout_s * wih0_row)      # steps >= 1: bout*W_ih0^T folded in
    b1 = prep(bih1 + bhh1)

    w_q = jnp.concatenate([prep(wih1.T), prep(whh0.T)], axis=1)    # (H, 8H)
    w_pb = jnp.concatenate([prep(w_fb), prep(whh1.T)], axis=1)     # (H, 8H)

    head = jnp.zeros((8, 2 * G), f32)
    head = head.at[0, 0:G].set(b00)
    head = head.at[1, 0:G].set(b0p)
    head = head.at[2, 0:G].set(b1)
    head = head.at[3, 0:H].set(wout_row)
    slab = jnp.concatenate([head, w_q, w_pb], axis=0)              # (8 + 2H, 8H), one DMA

    hc = jnp.concatenate([h0, c0], axis=0).astype(f32)             # (4, B, H): h_l0,h_l1,c_l0,c_l1
    targets_shift = (targets.T - bout_s).astype(f32)               # (B, T), head bias pre-folded

    vmem = pl.BlockSpec(memory_space=pltpu.MemorySpace.VMEM)
    flops = (2 + 2 * T) * 2 * B * H * (2 * G)                      # MXU work (dominant term)
    transc = T * 2 * B * (G + H)                                   # sigmoid + tanh(c)
    bytes_acc = 4 * (slab.size + hc.size + targets_shift.size + B + 1)

    loss, out_nb = pl.pallas_call(
        _lstm_decoder_kernel,
        out_shape=(jax.ShapeDtypeStruct((1, 1), f32),
                   jax.ShapeDtypeStruct((B, 1), f32)),
        in_specs=[vmem, vmem, vmem],
        out_specs=(vmem, vmem),
        compiler_params=pltpu.CompilerParams(vmem_limit_bytes=4 * 1024 * 1024),
        cost_estimate=pl.CostEstimate(flops=flops, transcendentals=transc,
                                      bytes_accessed=bytes_acc),
    )(targets_shift, slab, hc)
    return loss[0, 0], out_nb + bout_s                             # add the head bias off-kernel


def decoder_reference(targets, hidden, params):
    """Pure-JAX mirror of the PyTorch forward (eval mode, MSE criterion)."""
    h0, c0 = hidden
    T, B = targets.shape
    (wih0, whh0, bih0, bhh0, wih1, whh1, bih1, bhh1, wout, bout) = params
    hi = jax.lax.Precision.HIGHEST

    def cell(x, h, c, wih, whh, bih, bhh):
        gates = (jnp.dot(x, wih.T, precision=hi) + bih
                 + jnp.dot(h, whh.T, precision=hi) + bhh)
        i, f, g, o = jnp.split(gates, 4, axis=-1)
        i, f, o = jax.nn.sigmoid(i), jax.nn.sigmoid(f), jax.nn.sigmoid(o)
        g = jnp.tanh(g)
        c_new = f * c + i * g
        return jnp.tanh(c_new) * o, c_new

    x = jnp.zeros((B, 1), jnp.float32)
    h_l0, c_l0, h_l1, c_l1 = h0[0], c0[0], h0[1], c0[1]
    loss = 0.0
    for t in range(T):
        h_l0, c_l0 = cell(x, h_l0, c_l0, wih0, whh0, bih0, bhh0)
        h_l1, c_l1 = cell(h_l0, h_l1, c_l1, wih1, whh1, bih1, bhh1)
        pred = jnp.dot(h_l1, wout.T, precision=hi) + bout
        loss = loss + jnp.mean((pred - targets[t].reshape(-1, 1)) ** 2)
        x = pred
    return loss, x


if __name__ == "__main__":
    H, B, T, L = 32, 8, 6, 2  # hidden_dim, batch, num_steps, num_layers

    key = jax.random.PRNGKey(0)
    keys = jax.random.split(key, 16)
    bound = 1.0 / (H ** 0.5)
    u = lambda kk, shape: jax.random.uniform(kk, shape, jnp.float32, -bound, bound)

    params = (
        u(keys[0], (4 * H, 1)),   # weight_ih_l0
        u(keys[1], (4 * H, H)),   # weight_hh_l0
        u(keys[2], (4 * H,)),     # bias_ih_l0
        u(keys[3], (4 * H,)),     # bias_hh_l0
        u(keys[4], (4 * H, H)),   # weight_ih_l1
        u(keys[5], (4 * H, H)),   # weight_hh_l1
        u(keys[6], (4 * H,)),     # bias_ih_l1
        u(keys[7], (4 * H,)),     # bias_hh_l1
        u(keys[8], (1, H)),       # out.weight
        u(keys[9], (1,)),         # out.bias
    )

    targets = jax.random.normal(keys[10], (T, B), jnp.float32)   # PyTorch `outputs`
    h0 = 0.1 * jax.random.normal(keys[11], (L, B, H), jnp.float32)
    c0 = 0.1 * jax.random.normal(keys[12], (L, B, H), jnp.float32)

    loss, out = decoder_forward(targets, (h0, c0), params)
    jax.block_until_ready((loss, out))

    loss_ref, out_ref = decoder_reference(targets, (h0, c0), params)
    assert out.shape == (B, 1) and loss.shape == ()
    assert jnp.allclose(loss, loss_ref, rtol=1e-3, atol=1e-4), (loss, loss_ref)
    assert jnp.allclose(out, out_ref, rtol=1e-3, atol=1e-4)

    print("KERNEL_OK")
</pallas_src>

<mosaic_0001>
module attributes {stable_mosaic.version = 11 : i64} {
  func.func @_lstm_decoder_kernel(%arg0: memref<8x6xf32, #tpu.memory_space<vmem>>, %arg1: memref<72x256xf32, #tpu.memory_space<vmem>>, %arg2: memref<4x8x32xf32, #tpu.memory_space<vmem>>, %arg3: memref<1x1xf32, #tpu.memory_space<vmem>>, %arg4: memref<8x1xf32, #tpu.memory_space<vmem>>) attributes {dimension_semantics = [], scalar_prefetch = 0 : i64, scratch_operands = 0 : i64, tpu.core_type = #tpu.core_type<tc>} {
    %c0 = arith.constant 0 : index
    %c0_0 = arith.constant 0 : index
    %0 = vector.load %arg1[%c0, %c0_0] : memref<72x256xf32, #tpu.memory_space<vmem>>, vector<1x128xf32>
    %1 = vector.shape_cast %0 : vector<1x128xf32> to vector<1x128xf32>
    %2 = vector.broadcast %1 : vector<1x128xf32> to vector<8x128xf32>
    %c1 = arith.constant 1 : index
    %c0_1 = arith.constant 0 : index
    %3 = vector.load %arg1[%c1, %c0_1] : memref<72x256xf32, #tpu.memory_space<vmem>>, vector<1x128xf32>
    %4 = vector.shape_cast %3 : vector<1x128xf32> to vector<1x128xf32>
    %5 = vector.broadcast %4 : vector<1x128xf32> to vector<8x128xf32>
    %c2 = arith.constant 2 : index
    %c0_2 = arith.constant 0 : index
    %6 = vector.load %arg1[%c2, %c0_2] : memref<72x256xf32, #tpu.memory_space<vmem>>, vector<1x128xf32>
    %7 = vector.shape_cast %6 : vector<1x128xf32> to vector<1x128xf32>
    %8 = vector.broadcast %7 : vector<1x128xf32> to vector<8x128xf32>
    %c3 = arith.constant 3 : index
    %c0_3 = arith.constant 0 : index
    %9 = vector.load %arg1[%c3, %c0_3] : memref<72x256xf32, #tpu.memory_space<vmem>>, vector<1x32xf32>
    %10 = vector.shape_cast %9 : vector<1x32xf32> to vector<1x32xf32>
    %11 = vector.broadcast %10 : vector<1x32xf32> to vector<8x32xf32>
    %c8 = arith.constant 8 : index
    %c0_4 = arith.constant 0 : index
    %12 = vector.load %arg1[%c8, %c0_4] : memref<72x256xf32, #tpu.memory_space<vmem>>, vector<32x256xf32>
    %c40 = arith.constant 40 : index
    %c0_5 = arith.constant 0 : index
    %13 = vector.load %arg1[%c40, %c0_5] : memref<72x256xf32, #tpu.memory_space<vmem>>, vector<32x256xf32>
    %c0_6 = arith.constant 0 : index
    %c0_7 = arith.constant 0 : index
    %c0_8 = arith.constant 0 : index
    %14 = vector.load %arg2[%c0_6, %c0_7, %c0_8] : memref<4x8x32xf32, #tpu.memory_space<vmem>>, vector<1x8x32xf32>
    %15 = vector.shape_cast %14 : vector<1x8x32xf32> to vector<8x32xf32>
    %cst = arith.constant dense<0.000000e+00> : vector<8x256xf32>
    %16 = tpu.matmul %15, %12, %cst {dimension_numbers = #tpu.dot_dimension_numbers<[1], [0], [0], [1], [0, 0, 1, 1], [], []>} : vector<8x32xf32>, vector<32x256xf32>, vector<8x256xf32> -> vector<8x256xf32>
    %c1_9 = arith.constant 1 : index
    %c0_10 = arith.constant 0 : index
    %c0_11 = arith.constant 0 : index
    %17 = vector.load %arg2[%c1_9, %c0_10, %c0_11] : memref<4x8x32xf32, #tpu.memory_space<vmem>>, vector<1x8x32xf32>
    %18 = vector.shape_cast %17 : vector<1x8x32xf32> to vector<8x32xf32>
    %cst_12 = arith.constant dense<0.000000e+00> : vector<8x256xf32>
    %19 = tpu.matmul %18, %13, %cst_12 {dimension_numbers = #tpu.dot_dimension_numbers<[1], [0], [0], [1], [0, 0, 1, 1], [], []>} : vector<8x32xf32>, vector<32x256xf32>, vector<8x256xf32> -> vector<8x256xf32>
    %c2_13 = arith.constant 2 : index
    %c0_14 = arith.constant 0 : index
    %c0_15 = arith.constant 0 : index
    %20 = vector.load %arg2[%c2_13, %c0_14, %c0_15] : memref<4x8x32xf32, #tpu.memory_space<vmem>>, vector<1x8x32xf32>
    %21 = vector.shape_cast %20 : vector<1x8x32xf32> to vector<8x32xf32>
    %c3_16 = arith.constant 3 : index
    %c0_17 = arith.constant 0 : index
    %c0_18 = arith.constant 0 : index
    %22 = vector.load %arg2[%c3_16, %c0_17, %c0_18] : memref<4x8x32xf32, #tpu.memory_space<vmem>>, vector<1x8x32xf32>
    %23 = vector.shape_cast %22 : vector<1x8x32xf32> to vector<8x32xf32>
    %24 = vector.extract_strided_slice %16 {offsets = [0, 128], sizes = [8, 128], strides = [1, 1]} : vector<8x256xf32> to vector<8x128xf32>
    %25 = arith.addf %24, %2 : vector<8x128xf32>
    %26 = vector.extract_strided_slice %19 {offsets = [0, 128], sizes = [8, 128], strides = [1, 1]} : vector<8x256xf32> to vector<8x128xf32>
    %27 = arith.negf %25 : vector<8x128xf32>
    %28 = math.exp %27 : vector<8x128xf32>
    %cst_19 = arith.constant 1.000000e+00 : f32
    %29 = vector.broadcast %cst_19 : f32 to vector<8x128xf32>
    %30 = arith.addf %29, %28 : vector<8x128xf32>
    %31 = arith.divf %29, %30 : vector<8x128xf32>
    %32 = vector.extract_strided_slice %31 {offsets = [0, 0], sizes = [8, 32], strides = [1, 1]} : vector<8x128xf32> to vector<8x32xf32>
    %33 = vector.extract_strided_slice %31 {offsets = [0, 32], sizes = [8, 32], strides = [1, 1]} : vector<8x128xf32> to vector<8x32xf32>
    %34 = vector.extract_strided_slice %31 {offsets = [0, 64], sizes = [8, 32], strides = [1, 1]} : vector<8x128xf32> to vector<8x32xf32>
    %cst_20 = arith.constant 2.000000e+00 : f32
    %35 = vector.broadcast %cst_20 : f32 to vector<8x32xf32>
    %36 = arith.mulf %35, %34 : vector<8x32xf32>
    %cst_21 = arith.constant 1.000000e+00 : f32
    %37 = vector.broadcast %cst_21 : f32 to vector<8x32xf32>
    %38 = arith.subf %36, %37 : vector<8x32xf32>
    %39 = vector.extract_strided_slice %31 {offsets = [0, 96], sizes = [8, 32], strides = [1, 1]} : vector<8x128xf32> to vector<8x32xf32>
    %40 = arith.mulf %32, %21 : vector<8x32xf32>
    %41 = arith.mulf %33, %38 : vector<8x32xf32>
    %42 = arith.addf %40, %41 : vector<8x32xf32>
    %43 = math.tanh %42 : vector<8x32xf32>
    %44 = arith.mulf %39, %43 : vector<8x32xf32>
    %cst_22 = arith.constant dense<0.000000e+00> : vector<8x256xf32>
    %45 = tpu.matmul %44, %12, %cst_22 {dimension_numbers = #tpu.dot_dimension_numbers<[1], [0], [0], [1], [0, 0, 1, 1], [], []>} : vector<8x32xf32>, vector<32x256xf32>, vector<8x256xf32> -> vector<8x256xf32>
    %46 = vector.extract_strided_slice %45 {offsets = [0, 0], sizes = [8, 128], strides = [1, 1]} : vector<8x256xf32> to vector<8x128xf32>
    %47 = arith.addf %46, %26 : vector<8x128xf32>
    %48 = arith.addf %47, %8 : vector<8x128xf32>
    %49 = arith.negf %48 : vector<8x128xf32>
    %50 = math.exp %49 : vector<8x128xf32>
    %cst_23 = arith.constant 1.000000e+00 : f32
    %51 = vector.broadcast %cst_23 : f32 to vector<8x128xf32>
    %52 = arith.addf %51, %50 : vector<8x128xf32>
    %53 = arith.divf %51, %52 : vector<8x128xf32>
    %54 = vector.extract_strided_slice %53 {offsets = [0, 0], sizes = [8, 32], strides = [1, 1]} : vector<8x128xf32> to vector<8x32xf32>
    %55 = vector.extract_strided_slice %53 {offsets = [0, 32], sizes = [8, 32], strides = [1, 1]} : vector<8x128xf32> to vector<8x32xf32>
    %56 = vector.extract_strided_slice %53 {offsets = [0, 64], sizes = [8, 32], strides = [1, 1]} : vector<8x128xf32> to vector<8x32xf32>
    %cst_24 = arith.constant 2.000000e+00 : f32
    %57 = vector.broadcast %cst_24 : f32 to vector<8x32xf32>
    %58 = arith.mulf %57, %56 : vector<8x32xf32>
    %cst_25 = arith.constant 1.000000e+00 : f32
    %59 = vector.broadcast %cst_25 : f32 to vector<8x32xf32>
    %60 = arith.subf %58, %59 : vector<8x32xf32>
    %61 = vector.extract_strided_slice %53 {offsets = [0, 96], sizes = [8, 32], strides = [1, 1]} : vector<8x128xf32> to vector<8x32xf32>
    %62 = arith.mulf %54, %23 : vector<8x32xf32>
    %63 = arith.mulf %55, %60 : vector<8x32xf32>
    %64 = arith.addf %62, %63 : vector<8x32xf32>
    %65 = math.tanh %64 : vector<8x32xf32>
    %66 = arith.mulf %61, %65 : vector<8x32xf32>
    %cst_26 = arith.constant dense<0.000000e+00> : vector<8x256xf32>
    %67 = tpu.matmul %66, %13, %cst_26 {dimension_numbers = #tpu.dot_dimension_numbers<[1], [0], [0], [1], [0, 0, 1, 1], [], []>} : vector<8x32xf32>, vector<32x256xf32>, vector<8x256xf32> -> vector<8x256xf32>
    %68 = arith.mulf %66, %11 : vector<8x32xf32>
    %cst_27 = arith.constant dense<0.000000e+00> : vector<8xf32>
    %69 = vector.multi_reduction <add>, %68, %cst_27 [1] : vector<8x32xf32> to vector<8xf32>
    %70 = vector.shape_cast %69 : vector<8xf32> to vector<8x1xf32>
    %71 = vector.extract_strided_slice %45 {offsets = [0, 128], sizes = [8, 128], strides = [1, 1]} : vector<8x256xf32> to vector<8x128xf32>
    %72 = vector.extract_strided_slice %67 {offsets = [0, 0], sizes = [8, 128], strides = [1, 1]} : vector<8x256xf32> to vector<8x128xf32>
    %73 = arith.addf %71, %72 : vector<8x128xf32>
    %74 = arith.addf %73, %5 : vector<8x128xf32>
    %75 = vector.extract_strided_slice %67 {offsets = [0, 128], sizes = [8, 128], strides = [1, 1]} : vector<8x256xf32> to vector<8x128xf32>
    %76 = arith.negf %74 : vector<8x128xf32>
    %77 = math.exp %76 : vector<8x128xf32>
    %cst_28 = arith.constant 1.000000e+00 : f32
    %78 = vector.broadcast %cst_28 : f32 to vector<8x128xf32>
    %79 = arith.addf %78, %77 : vector<8x128xf32>
    %80 = arith.divf %78, %79 : vector<8x128xf32>
    %81 = vector.extract_strided_slice %80 {offsets = [0, 0], sizes = [8, 32], strides = [1, 1]} : vector<8x128xf32> to vector<8x32xf32>
    %82 = vector.extract_strided_slice %80 {offsets = [0, 32], sizes = [8, 32], strides = [1, 1]} : vector<8x128xf32> to vector<8x32xf32>
    %83 = vector.extract_strided_slice %80 {offsets = [0, 64], sizes = [8, 32], strides = [1, 1]} : vector<8x128xf32> to vector<8x32xf32>
    %cst_29 = arith.constant 2.000000e+00 : f32
    %84 = vector.broadcast %cst_29 : f32 to vector<8x32xf32>
    %85 = arith.mulf %84, %83 : vector<8x32xf32>
    %cst_30 = arith.constant 1.000000e+00 : f32
    %86 = vector.broadcast %cst_30 : f32 to vector<8x32xf32>
    %87 = arith.subf %85, %86 : vector<8x32xf32>
    %88 = vector.extract_strided_slice %80 {offsets = [0, 96], sizes = [8, 32], strides = [1, 1]} : vector<8x128xf32> to vector<8x32xf32>
    %89 = arith.mulf %81, %42 : vector<8x32xf32>
    %90 = arith.mulf %82, %87 : vector<8x32xf32>
    %91 = arith.addf %89, %90 : vector<8x32xf32>
    %92 = math.tanh %91 : vector<8x32xf32>
    %93 = arith.mulf %88, %92 : vector<8x32xf32>
    %cst_31 = arith.constant dense<0.000000e+00> : vector<8x256xf32>
    %94 = tpu.matmul %93, %12, %cst_31 {dimension_numbers = #tpu.dot_dimension_numbers<[1], [0], [0], [1], [0, 0, 1, 1], [], []>} : vector<8x32xf32>, vector<32x256xf32>, vector<8x256xf32> -> vector<8x256xf32>
    %95 = vector.extract_strided_slice %94 {offsets = [0, 0], sizes = [8, 128], strides = [1, 1]} : vector<8x256xf32> to vector<8x128xf32>
    %96 = arith.addf %95, %75 : vector<8x128xf32>
    %97 = arith.addf %96, %8 : vector<8x128xf32>
    %98 = arith.negf %97 : vector<8x128xf32>
    %99 = math.exp %98 : vector<8x128xf32>
    %cst_32 = arith.constant 1.000000e+00 : f32
    %100 = vector.broadcast %cst_32 : f32 to vector<8x128xf32>
    %101 = arith.addf %100, %99 : vector<8x128xf32>
    %102 = arith.divf %100, %101 : vector<8x128xf32>
    %103 = vector.extract_strided_slice %102 {offsets = [0, 0], sizes = [8, 32], strides = [1, 1]} : vector<8x128xf32> to vector<8x32xf32>
    %104 = vector.extract_strided_slice %102 {offsets = [0, 32], sizes = [8, 32], strides = [1, 1]} : vector<8x128xf32> to vector<8x32xf32>
    %105 = vector.extract_strided_slice %102 {offsets = [0, 64], sizes = [8, 32], strides = [1, 1]} : vector<8x128xf32> to vector<8x32xf32>
    %cst_33 = arith.constant 2.000000e+00 : f32
    %106 = vector.broadcast %cst_33 : f32 to vector<8x32xf32>
    %107 = arith.mulf %106, %105 : vector<8x32xf32>
    %cst_34 = arith.constant 1.000000e+00 : f32
    %108 = vector.broadcast %cst_34 : f32 to vector<8x32xf32>
    %109 = arith.subf %107, %108 : vector<8x32xf32>
    %110 = vector.extract_strided_slice %102 {offsets = [0, 96], sizes = [8, 32], strides = [1, 1]} : vector<8x128xf32> to vector<8x32xf32>
    %111 = arith.mulf %103, %64 : vector<8x32xf32>
    %112 = arith.mulf %104, %109 : vector<8x32xf32>
    %113 = arith.addf %111, %112 : vector<8x32xf32>
    %114 = math.tanh %113 : vector<8x32xf32>
    %115 = arith.mulf %110, %114 : vector<8x32xf32>
    %cst_35 = arith.constant dense<0.000000e+00> : vector<8x256xf32>
    %116 = tpu.matmul %115, %13, %cst_35 {dimension_numbers = #tpu.dot_dimension_numbers<[1], [0], [0], [1], [0, 0, 1, 1], [], []>} : vector<8x32xf32>, vector<32x256xf32>, vector<8x256xf32> -> vector<8x256xf32>
    %117 = arith.mulf %115, %11 : vector<8x32xf32>
    %cst_36 = arith.constant dense<0.000000e+00> : vector<8xf32>
    %118 = vector.multi_reduction <add>, %117, %cst_36 [1] : vector<8x32xf32> to vector<8xf32>
    %119 = vector.shape_cast %118 : vector<8xf32> to vector<8x1xf32>
    %120 = vector.extract_strided_slice %94 {offsets = [0, 128], sizes = [8, 128], strides = [1, 1]} : vector<8x256xf32> to vector<8x128xf32>
    %121 = vector.extract_strided_slice %116 {offsets = [0, 0], sizes = [8, 128], strides = [1, 1]} : vector<8x256xf32> to vector<8x128xf32>
    %122 = arith.addf %120, %121 : vector<8x128xf32>
    %123 = arith.addf %122, %5 : vector<8x128xf32>
    %124 = vector.extract_strided_slice %116 {offsets = [0, 128], sizes = [8, 128], strides = [1, 1]} : vector<8x256xf32> to vector<8x128xf32>
    %125 = arith.negf %123 : vector<8x128xf32>
    %126 = math.exp %125 : vector<8x128xf32>
    %cst_37 = arith.constant 1.000000e+00 : f32
    %127 = vector.broadcast %cst_37 : f32 to vector<8x128xf32>
    %128 = arith.addf %127, %126 : vector<8x128xf32>
    %129 = arith.divf %127, %128 : vector<8x128xf32>
    %130 = vector.extract_strided_slice %129 {offsets = [0, 0], sizes = [8, 32], strides = [1, 1]} : vector<8x128xf32> to vector<8x32xf32>
    %131 = vector.extract_strided_slice %129 {offsets = [0, 32], sizes = [8, 32], strides = [1, 1]} : vector<8x128xf32> to vector<8x32xf32>
    %132 = vector.extract_strided_slice %129 {offsets = [0, 64], sizes = [8, 32], strides = [1, 1]} : vector<8x128xf32> to vector<8x32xf32>
    %cst_38 = arith.constant 2.000000e+00 : f32
    %133 = vector.broadcast %cst_38 : f32 to vector<8x32xf32>
    %134 = arith.mulf %133, %132 : vector<8x32xf32>
    %cst_39 = arith.constant 1.000000e+00 : f32
    %135 = vector.broadcast %cst_39 : f32 to vector<8x32xf32>
    %136 = arith.subf %134, %135 : vector<8x32xf32>
    %137 = vector.extract_strided_slice %129 {offsets = [0, 96], sizes = [8, 32], strides = [1, 1]} : vector<8x128xf32> to vector<8x32xf32>
    %138 = arith.mulf %130, %91 : vector<8x32xf32>
    %139 = arith.mulf %131, %136 : vector<8x32xf32>
    %140 = arith.addf %138, %139 : vector<8x32xf32>
    %141 = math.tanh %140 : vector<8x32xf32>
    %142 = arith.mulf %137, %141 : vector<8x32xf32>
    %cst_40 = arith.constant dense<0.000000e+00> : vector<8x256xf32>
    %143 = tpu.matmul %142, %12, %cst_40 {dimension_numbers = #tpu.dot_dimension_numbers<[1], [0], [0], [1], [0, 0, 1, 1], [], []>} : vector<8x32xf32>, vector<32x256xf32>, vector<8x256xf32> -> vector<8x256xf32>
    %144 = vector.extract_strided_slice %143 {offsets = [0, 0], sizes = [8, 128], strides = [1, 1]} : vector<8x256xf32> to vector<8x128xf32>
    %145 = arith.addf %144, %124 : vector<8x128xf32>
    %146 = arith.addf %145, %8 : vector<8x128xf32>
    %147 = arith.negf %146 : vector<8x128xf32>
    %148 = math.exp %147 : vector<8x128xf32>
    %cst_41 = arith.constant 1.000000e+00 : f32
    %149 = vector.broadcast %cst_41 : f32 to vector<8x128xf32>
    %150 = arith.addf %149, %148 : vector<8x128xf32>
    %151 = arith.divf %149, %150 : vector<8x128xf32>
    %152 = vector.extract_strided_slice %151 {offsets = [0, 0], sizes = [8, 32], strides = [1, 1]} : vector<8x128xf32> to vector<8x32xf32>
    %153 = vector.extract_strided_slice %151 {offsets = [0, 32], sizes = [8, 32], strides = [1, 1]} : vector<8x128xf32> to vector<8x32xf32>
    %154 = vector.extract_strided_slice %151 {offsets = [0, 64], sizes = [8, 32], strides = [1, 1]} : vector<8x128xf32> to vector<8x32xf32>
    %cst_42 = arith.constant 2.000000e+00 : f32
    %155 = vector.broadcast %cst_42 : f32 to vector<8x32xf32>
    %156 = arith.mulf %155, %154 : vector<8x32xf32>
    %cst_43 = arith.constant 1.000000e+00 : f32
    %157 = vector.broadcast %cst_43 : f32 to vector<8x32xf32>
    %158 = arith.subf %156, %157 : vector<8x32xf32>
    %159 = vector.extract_strided_slice %151 {offsets = [0, 96], sizes = [8, 32], strides = [1, 1]} : vector<8x128xf32> to vector<8x32xf32>
    %160 = arith.mulf %152, %113 : vector<8x32xf32>
    %161 = arith.mulf %153, %158 : vector<8x32xf32>
    %162 = arith.addf %160, %161 : vector<8x32xf32>
    %163 = math.tanh %162 : vector<8x32xf32>
    %164 = arith.mulf %159, %163 : vector<8x32xf32>
    %cst_44 = arith.constant dense<0.000000e+00> : vector<8x256xf32>
    %165 = tpu.matmul %164, %13, %cst_44 {dimension_numbers = #tpu.dot_dimension_numbers<[1], [0], [0], [1], [0, 0, 1, 1], [], []>} : vector<8x32xf32>, vector<32x256xf32>, vector<8x256xf32> -> vector<8x256xf32>
    %166 = arith.mulf %164, %11 : vector<8x32xf32>
    %cst_45 = arith.constant dense<0.000000e+00> : vector<8xf32>
    %167 = vector.multi_reduction <add>, %166, %cst_45 [1] : vector<8x32xf32> to vector<8xf32>
    %168 = vector.shape_cast %167 : vector<8xf32> to vector<8x1xf32>
    %169 = vector.extract_strided_slice %143 {offsets = [0, 128], sizes = [8, 128], strides = [1, 1]} : vector<8x256xf32> to vector<8x128xf32>
    %170 = vector.extract_strided_slice %165 {offsets = [0, 0], sizes = [8, 128], strides = [1, 1]} : vector<8x256xf32> to vector<8x128xf32>
    %171 = arith.addf %169, %170 : vector<8x128xf32>
    %172 = arith.addf %171, %5 : vector<8x128xf32>
    %173 = vector.extract_strided_slice %165 {offsets = [0, 128], sizes = [8, 128], strides = [1, 1]} : vector<8x256xf32> to vector<8x128xf32>
    %174 = arith.negf %172 : vector<8x128xf32>
    %175 = math.exp %174 : vector<8x128xf32>
    %cst_46 = arith.constant 1.000000e+00 : f32
    %176 = vector.broadcast %cst_46 : f32 to vector<8x128xf32>
    %177 = arith.addf %176, %175 : vector<8x128xf32>
    %178 = arith.divf %176, %177 : vector<8x128xf32>
    %179 = vector.extract_strided_slice %178 {offsets = [0, 0], sizes = [8, 32], strides = [1, 1]} : vector<8x128xf32> to vector<8x32xf32>
    %180 = vector.extract_strided_slice %178 {offsets = [0, 32], sizes = [8, 32], strides = [1, 1]} : vector<8x128xf32> to vector<8x32xf32>
    %181 = vector.extract_strided_slice %178 {offsets = [0, 64], sizes = [8, 32], strides = [1, 1]} : vector<8x128xf32> to vector<8x32xf32>
    %cst_47 = arith.constant 2.000000e+00 : f32
    %182 = vector.broadcast %cst_47 : f32 to vector<8x32xf32>
    %183 = arith.mulf %182, %181 : vector<8x32xf32>
    %cst_48 = arith.constant 1.000000e+00 : f32
    %184 = vector.broadcast %cst_48 : f32 to vector<8x32xf32>
    %185 = arith.subf %183, %184 : vector<8x32xf32>
    %186 = vector.extract_strided_slice %178 {offsets = [0, 96], sizes = [8, 32], strides = [1, 1]} : vector<8x128xf32> to vector<8x32xf32>
    %187 = arith.mulf %179, %140 : vector<8x32xf32>
    %188 = arith.mulf %180, %185 : vector<8x32xf32>
    %189 = arith.addf %187, %188 : vector<8x32xf32>
    %190 = math.tanh %189 : vector<8x32xf32>
    %191 = arith.mulf %186, %190 : vector<8x32xf32>
    %cst_49 = arith.constant dense<0.000000e+00> : vector<8x256xf32>
    %192 = tpu.matmul %191, %12, %cst_49 {dimension_numbers = #tpu.dot_dimension_numbers<[1], [0], [0], [1], [0, 0, 1, 1], [], []>} : vector<8x32xf32>, vector<32x256xf32>, vector<8x256xf32> -> vector<8x256xf32>
    %193 = vector.extract_strided_slice %192 {offsets = [0, 0], sizes = [8, 128], strides = [1, 1]} : vector<8x256xf32> to vector<8x128xf32>
    %194 = arith.addf %193, %173 : vector<8x128xf32>
    %195 = arith.addf %194, %8 : vector<8x128xf32>
    %196 = arith.negf %195 : vector<8x128xf32>
    %197 = math.exp %196 : vector<8x128xf32>
    %cst_50 = arith.constant 1.000000e+00 : f32
    %198 = vector.broadcast %cst_50 : f32 to vector<8x128xf32>
    %199 = arith.addf %198, %197 : vector<8x128xf32>
    %200 = arith.divf %198, %199 : vector<8x128xf32>
    %201 = vector.extract_strided_slice %200 {offsets = [0, 0], sizes = [8, 32], strides = [1, 1]} : vector<8x128xf32> to vector<8x32xf32>
    %202 = vector.extract_strided_slice %200 {offsets = [0, 32], sizes = [8, 32], strides = [1, 1]} : vector<8x128xf32> to vector<8x32xf32>
    %203 = vector.extract_strided_slice %200 {offsets = [0, 64], sizes = [8, 32], strides = [1, 1]} : vector<8x128xf32> to vector<8x32xf32>
    %cst_51 = arith.constant 2.000000e+00 : f32
    %204 = vector.broadcast %cst_51 : f32 to vector<8x32xf32>
    %205 = arith.mulf %204, %203 : vector<8x32xf32>
    %cst_52 = arith.constant 1.000000e+00 : f32
    %206 = vector.broadcast %cst_52 : f32 to vector<8x32xf32>
    %207 = arith.subf %205, %206 : vector<8x32xf32>
    %208 = vector.extract_strided_slice %200 {offsets = [0, 96], sizes = [8, 32], strides = [1, 1]} : vector<8x128xf32> to vector<8x32xf32>
    %209 = arith.mulf %201, %162 : vector<8x32xf32>
    %210 = arith.mulf %202, %207 : vector<8x32xf32>
    %211 = arith.addf %209, %210 : vector<8x32xf32>
    %212 = math.tanh %211 : vector<8x32xf32>
    %213 = arith.mulf %208, %212 : vector<8x32xf32>
    %cst_53 = arith.constant dense<0.000000e+00> : vector<8x256xf32>
    %214 = tpu.matmul %213, %13, %cst_53 {dimension_numbers = #tpu.dot_dimension_numbers<[1], [0], [0], [1], [0, 0, 1, 1], [], []>} : vector<8x32xf32>, vector<32x256xf32>, vector<8x256xf32> -> vector<8x256xf32>
    %215 = arith.mulf %213, %11 : vector<8x32xf32>
    %cst_54 = arith.constant dense<0.000000e+00> : vector<8xf32>
    %216 = vector.multi_reduction <add>, %215, %cst_54 [1] : vector<8x32xf32> to vector<8xf32>
    %217 = vector.shape_cast %216 : vector<8xf32> to vector<8x1xf32>
    %218 = vector.extract_strided_slice %192 {offsets = [0, 128], sizes = [8, 128], strides = [1, 1]} : vector<8x256xf32> to vector<8x128xf32>
    %219 = vector.extract_strided_slice %214 {offsets = [0, 0], sizes = [8, 128], strides = [1, 1]} : vector<8x256xf32> to vector<8x128xf32>
    %220 = arith.addf %218, %219 : vector<8x128xf32>
    %221 = arith.addf %220, %5 : vector<8x128xf32>
    %222 = vector.extract_strided_slice %214 {offsets = [0, 128], sizes = [8, 128], strides = [1, 1]} : vector<8x256xf32> to vector<8x128xf32>
    %223 = arith.negf %221 : vector<8x128xf32>
    %224 = math.exp %223 : vector<8x128xf32>
    %cst_55 = arith.constant 1.000000e+00 : f32
    %225 = vector.broadcast %cst_55 : f32 to vector<8x128xf32>
    %226 = arith.addf %225, %224 : vector<8x128xf32>
    %227 = arith.divf %225, %226 : vector<8x128xf32>
    %228 = vector.extract_strided_slice %227 {offsets = [0, 0], sizes = [8, 32], strides = [1, 1]} : vector<8x128xf32> to vector<8x32xf32>
    %229 = vector.extract_strided_slice %227 {offsets = [0, 32], sizes = [8, 32], strides = [1, 1]} : vector<8x128xf32> to vector<8x32xf32>
    %230 = vector.extract_strided_slice %227 {offsets = [0, 64], sizes = [8, 32], strides = [1, 1]} : vector<8x128xf32> to vector<8x32xf32>
    %cst_56 = arith.constant 2.000000e+00 : f32
    %231 = vector.broadcast %cst_56 : f32 to vector<8x32xf32>
    %232 = arith.mulf %231, %230 : vector<8x32xf32>
    %cst_57 = arith.constant 1.000000e+00 : f32
    %233 = vector.broadcast %cst_57 : f32 to vector<8x32xf32>
    %234 = arith.subf %232, %233 : vector<8x32xf32>
    %235 = vector.extract_strided_slice %227 {offsets = [0, 96], sizes = [8, 32], strides = [1, 1]} : vector<8x128xf32> to vector<8x32xf32>
    %236 = arith.mulf %228, %189 : vector<8x32xf32>
    %237 = arith.mulf %229, %234 : vector<8x32xf32>
    %238 = arith.addf %236, %237 : vector<8x32xf32>
    %239 = math.tanh %238 : vector<8x32xf32>
    %240 = arith.mulf %235, %239 : vector<8x32xf32>
    %cst_58 = arith.constant dense<0.000000e+00> : vector<8x256xf32>
    %241 = tpu.matmul %240, %12, %cst_58 {dimension_numbers = #tpu.dot_dimension_numbers<[1], [0], [0], [1], [0, 0, 1, 1], [], []>} : vector<8x32xf32>, vector<32x256xf32>, vector<8x256xf32> -> vector<8x256xf32>
    %242 = vector.extract_strided_slice %241 {offsets = [0, 0], sizes = [8, 128], strides = [1, 1]} : vector<8x256xf32> to vector<8x128xf32>
    %243 = arith.addf %242, %222 : vector<8x128xf32>
    %244 = arith.addf %243, %8 : vector<8x128xf32>
    %245 = arith.negf %244 : vector<8x128xf32>
    %246 = math.exp %245 : vector<8x128xf32>
    %cst_59 = arith.constant 1.000000e+00 : f32
    %247 = vector.broadcast %cst_59 : f32 to vector<8x128xf32>
    %248 = arith.addf %247, %246 : vector<8x128xf32>
    %249 = arith.divf %247, %248 : vector<8x128xf32>
    %250 = vector.extract_strided_slice %249 {offsets = [0, 0], sizes = [8, 32], strides = [1, 1]} : vector<8x128xf32> to vector<8x32xf32>
    %251 = vector.extract_strided_slice %249 {offsets = [0, 32], sizes = [8, 32], strides = [1, 1]} : vector<8x128xf32> to vector<8x32xf32>
    %252 = vector.extract_strided_slice %249 {offsets = [0, 64], sizes = [8, 32], strides = [1, 1]} : vector<8x128xf32> to vector<8x32xf32>
    %cst_60 = arith.constant 2.000000e+00 : f32
    %253 = vector.broadcast %cst_60 : f32 to vector<8x32xf32>
    %254 = arith.mulf %253, %252 : vector<8x32xf32>
    %cst_61 = arith.constant 1.000000e+00 : f32
    %255 = vector.broadcast %cst_61 : f32 to vector<8x32xf32>
    %256 = arith.subf %254, %255 : vector<8x32xf32>
    %257 = vector.extract_strided_slice %249 {offsets = [0, 96], sizes = [8, 32], strides = [1, 1]} : vector<8x128xf32> to vector<8x32xf32>
    %258 = arith.mulf %250, %211 : vector<8x32xf32>
    %259 = arith.mulf %251, %256 : vector<8x32xf32>
    %260 = arith.addf %258, %259 : vector<8x32xf32>
    %261 = math.tanh %260 : vector<8x32xf32>
    %262 = arith.mulf %257, %261 : vector<8x32xf32>
    %cst_62 = arith.constant dense<0.000000e+00> : vector<8x256xf32>
    %263 = tpu.matmul %262, %13, %cst_62 {dimension_numbers = #tpu.dot_dimension_numbers<[1], [0], [0], [1], [0, 0, 1, 1], [], []>} : vector<8x32xf32>, vector<32x256xf32>, vector<8x256xf32> -> vector<8x256xf32>
    %264 = arith.mulf %262, %11 : vector<8x32xf32>
    %cst_63 = arith.constant dense<0.000000e+00> : vector<8xf32>
    %265 = vector.multi_reduction <add>, %264, %cst_63 [1] : vector<8x32xf32> to vector<8xf32>
    %266 = vector.shape_cast %265 : vector<8xf32> to vector<8x1xf32>
    %267 = vector.extract_strided_slice %241 {offsets = [0, 128], sizes = [8, 128], strides = [1, 1]} : vector<8x256xf32> to vector<8x128xf32>
    %268 = vector.extract_strided_slice %263 {offsets = [0, 0], sizes = [8, 128], strides = [1, 1]} : vector<8x256xf32> to vector<8x128xf32>
    %269 = arith.addf %267, %268 : vector<8x128xf32>
    %270 = arith.addf %269, %5 : vector<8x128xf32>
    %271 = vector.extract_strided_slice %263 {offsets = [0, 128], sizes = [8, 128], strides = [1, 1]} : vector<8x256xf32> to vector<8x128xf32>
    %272 = arith.negf %270 : vector<8x128xf32>
    %273 = math.exp %272 : vector<8x128xf32>
    %cst_64 = arith.constant 1.000000e+00 : f32
    %274 = vector.broadcast %cst_64 : f32 to vector<8x128xf32>
    %275 = arith.addf %274, %273 : vector<8x128xf32>
    %276 = arith.divf %274, %275 : vector<8x128xf32>
    %277 = vector.extract_strided_slice %276 {offsets = [0, 0], sizes = [8, 32], strides = [1, 1]} : vector<8x128xf32> to vector<8x32xf32>
    %278 = vector.extract_strided_slice %276 {offsets = [0, 32], sizes = [8, 32], strides = [1, 1]} : vector<8x128xf32> to vector<8x32xf32>
    %279 = vector.extract_strided_slice %276 {offsets = [0, 64], sizes = [8, 32], strides = [1, 1]} : vector<8x128xf32> to vector<8x32xf32>
    %cst_65 = arith.constant 2.000000e+00 : f32
    %280 = vector.broadcast %cst_65 : f32 to vector<8x32xf32>
    %281 = arith.mulf %280, %279 : vector<8x32xf32>
    %cst_66 = arith.constant 1.000000e+00 : f32
    %282 = vector.broadcast %cst_66 : f32 to vector<8x32xf32>
    %283 = arith.subf %281, %282 : vector<8x32xf32>
    %284 = vector.extract_strided_slice %276 {offsets = [0, 96], sizes = [8, 32], strides = [1, 1]} : vector<8x128xf32> to vector<8x32xf32>
    %285 = arith.mulf %277, %238 : vector<8x32xf32>
    %286 = arith.mulf %278, %283 : vector<8x32xf32>
    %287 = arith.addf %285, %286 : vector<8x32xf32>
    %288 = math.tanh %287 : vector<8x32xf32>
    %289 = arith.mulf %284, %288 : vector<8x32xf32>
    %cst_67 = arith.constant dense<0.000000e+00> : vector<8x256xf32>
    %290 = tpu.matmul %289, %12, %cst_67 {dimension_numbers = #tpu.dot_dimension_numbers<[1], [0], [0], [1], [0, 0, 1, 1], [], []>} : vector<8x32xf32>, vector<32x256xf32>, vector<8x256xf32> -> vector<8x256xf32>
    %291 = vector.extract_strided_slice %290 {offsets = [0, 0], sizes = [8, 128], strides = [1, 1]} : vector<8x256xf32> to vector<8x128xf32>
    %292 = arith.addf %291, %271 : vector<8x128xf32>
    %293 = arith.addf %292, %8 : vector<8x128xf32>
    %294 = arith.negf %293 : vector<8x128xf32>
    %295 = math.exp %294 : vector<8x128xf32>
    %cst_68 = arith.constant 1.000000e+00 : f32
    %296 = vector.broadcast %cst_68 : f32 to vector<8x128xf32>
    %297 = arith.addf %296, %295 : vector<8x128xf32>
    %298 = arith.divf %296, %297 : vector<8x128xf32>
    %299 = vector.extract_strided_slice %298 {offsets = [0, 0], sizes = [8, 32], strides = [1, 1]} : vector<8x128xf32> to vector<8x32xf32>
    %300 = vector.extract_strided_slice %298 {offsets = [0, 32], sizes = [8, 32], strides = [1, 1]} : vector<8x128xf32> to vector<8x32xf32>
    %301 = vector.extract_strided_slice %298 {offsets = [0, 64], sizes = [8, 32], strides = [1, 1]} : vector<8x128xf32> to vector<8x32xf32>
    %cst_69 = arith.constant 2.000000e+00 : f32
    %302 = vector.broadcast %cst_69 : f32 to vector<8x32xf32>
    %303 = arith.mulf %302, %301 : vector<8x32xf32>
    %cst_70 = arith.constant 1.000000e+00 : f32
    %304 = vector.broadcast %cst_70 : f32 to vector<8x32xf32>
    %305 = arith.subf %303, %304 : vector<8x32xf32>
    %306 = vector.extract_strided_slice %298 {offsets = [0, 96], sizes = [8, 32], strides = [1, 1]} : vector<8x128xf32> to vector<8x32xf32>
    %307 = arith.mulf %299, %260 : vector<8x32xf32>
    %308 = arith.mulf %300, %305 : vector<8x32xf32>
    %309 = arith.addf %307, %308 : vector<8x32xf32>
    %310 = math.tanh %309 : vector<8x32xf32>
    %311 = arith.mulf %306, %310 : vector<8x32xf32>
    %312 = arith.mulf %311, %11 : vector<8x32xf32>
    %cst_71 = arith.constant dense<0.000000e+00> : vector<8xf32>
    %313 = vector.multi_reduction <add>, %312, %cst_71 [1] : vector<8x32xf32> to vector<8xf32>
    %314 = vector.shape_cast %313 : vector<8xf32> to vector<8x1xf32>
    %315 = tpu.concatenate %70, %119, %168, %217, %266, %314 in 1 : vector<8x1xf32>, vector<8x1xf32>, vector<8x1xf32>, vector<8x1xf32>, vector<8x1xf32>, vector<8x1xf32> -> vector<8x6xf32>
    %c0_72 = arith.constant 0 : index
    %c0_73 = arith.constant 0 : index
    %316 = vector.load %arg0[%c0_72, %c0_73] : memref<8x6xf32, #tpu.memory_space<vmem>>, vector<8x6xf32>
    %317 = arith.subf %315, %316 : vector<8x6xf32>
    %318 = arith.mulf %317, %317 : vector<8x6xf32>
    %319 = vector.shape_cast %318 : vector<8x6xf32> to vector<1x8x6xf32>
    %cst_74 = arith.constant dense<0.000000e+00> : vector<1xf32>
    %320 = vector.multi_reduction <add>, %319, %cst_74 [1, 2] : vector<1x8x6xf32> to vector<1xf32>
    %321 = vector.shape_cast %320 : vector<1xf32> to vector<1x1x1xf32>
    %322 = vector.extract %321[0, 0, 0] : f32 from vector<1x1x1xf32>
    %323 = vector.broadcast %322 : f32 to vector<1x1xf32>
    %cst_75 = arith.constant 1.250000e-01 : f32
    %324 = vector.broadcast %cst_75 : f32 to vector<1x1xf32>
    %325 = arith.mulf %323, %324 : vector<1x1xf32>
    %c0_76 = arith.constant 0 : index
    %c0_77 = arith.constant 0 : index
    %326 = vector.load %arg3[%c0_76, %c0_77] : memref<1x1xf32, #tpu.memory_space<vmem>>, vector<1x1xf32>
    tpu.vector_store %arg3[%c0_76, %c0_77], %325 {strides = array<i32>} : memref<1x1xf32, #tpu.memory_space<vmem>>, vector<1x1xf32>,
    %c0_78 = arith.constant 0 : index
    %c0_79 = arith.constant 0 : index
    %327 = vector.load %arg4[%c0_78, %c0_79] : memref<8x1xf32, #tpu.memory_space<vmem>>, vector<8x1xf32>
    tpu.vector_store %arg4[%c0_78, %c0_79], %314 {strides = array<i32>} : memref<8x1xf32, #tpu.memory_space<vmem>>, vector<8x1xf32>,
    return
  }
}

</mosaic_0001>

<llo_original>
// kernel: tpu_custom_call.1
$region0: #{tpu_custom_call.1}
  #allocation0 [shape = 'u32[]', space=smem, size = 0x4, offset = 0x4, fixed_abs, tag = 'smem constant byte address 0x4 - core index']
  #allocation1 [shape = 'u32[144,128]{1,0:T(1,128)}', space=vmem, size = 0x12000, scoped, tag = 'internal scratch']
  %s0 = inlined_call_operand.hbm [shape: f32[8,6], index: 0, kind: input, shape index: {}]
  %s1 = inlined_call_operand.hbm [shape: f32[72,256], index: 1, kind: input, shape index: {}]
  %s2 = inlined_call_operand.hbm [shape: f32[4,8,32], index: 2, kind: input, shape index: {}]
  %s3 = inlined_call_operand.hbm [shape: f32[1,1], index: 3, kind: output, shape index: {0}]
  %s4 = inlined_call_operand.vmem [shape: f32[8,1], index: 4, kind: output, shape index: {1}]
  %5 = xla_tuple %s3, %s4
  %s6 = sld [smem:[#allocation0]]
  $region42: #{tpu_custom_call.1} parent=0
    _
  %s8 = ssub.s32 1, %s6
  %s9 = scalar_select 0, %s8, %s6
  $region1: #{tpu_custom_call.1} parent=0
    #allocation2 [shape = 'u8[4096]{0}', space=vmem, size = 0x1000, scoped, tag = 'input window, operand 0, single buffered']
    #allocation3 [shape = 's32[1]{0}', space=sflag, size = 0x4, scoped, tag = 'scoped memory for tpu_custom_call.1']
    #allocation4 [shape = 's32[1]{0}', space=sflag, size = 0x4, scoped, tag = 'scoped memory for tpu_custom_call.1']
    #allocation5 [shape = 'u8[73728]{0}', space=vmem, size = 0x12000, scoped, tag = 'input window, operand 1, single buffered']
    #allocation6 [shape = 's32[1]{0}', space=sflag, size = 0x4, scoped, tag = 'scoped memory for tpu_custom_call.1']
    #allocation7 [shape = 'u8[16384]{0}', space=vmem, size = 0x4000, scoped, tag = 'input window, operand 2, single buffered']
    #allocation8 [shape = 'u8[512]{0}', space=vmem, size = 0x400, scoped, tag = 'output window, operand 0, single buffered']
    %10 = vsyncpa [#allocation3], 0
    %11 = vsyncpa [#allocation6], 0
    %12 = vsyncpa [#allocation4], 0
    // Predicated region
    $region2: #{tpu_custom_call.1} parent=1 // pred_check
      _
    $region3: #{tpu_custom_call.1} parent=1 // pred_check_branch
      %14 = sbr.rel (0) target = $region5
    $region4: #{tpu_custom_call.1} parent=1 // pred_region
      %s16 = ssub.s32 128, 128
      %17 = vsyncadd [#allocation3], %s16
      %s19 = sshll.u32 [#allocation2], 4
      %s20 = int_to_ptr.vmem [resolvable:$true] %s19
      %22 = dma.hbm_to_vmem [thread:$0]  %s0, 128, %s20, [#allocation3]
    $region5: #{tpu_custom_call.1} parent=1 // pred_fallthru
      _
    // Predicated region
    $region6: #{tpu_custom_call.1} parent=1 // pred_check
      _
    $region7: #{tpu_custom_call.1} parent=1 // pred_check_branch
      %24 = sbr.rel (0) target = $region9
    $region8: #{tpu_custom_call.1} parent=1 // pred_region
      %s26 = ssub.s32 2304, 2304
      %27 = vsyncadd [#allocation6], %s26
      %s28 = sshll.u32 [#allocation5], 4
      %s29 = int_to_ptr.vmem [resolvable:$true] %s28
      %34 = dma.hbm_to_vmem [thread:$0]  %s1, 2304, %s29, [#allocation6], 256, 256, 16
    $region9: #{tpu_custom_call.1} parent=1 // pred_fallthru
      _
    // Predicated region
    $region10: #{tpu_custom_call.1} parent=1 // pred_check
      _
    $region11: #{tpu_custom_call.1} parent=1 // pred_check_branch
      %36 = sbr.rel (0) target = $region13
    $region12: #{tpu_custom_call.1} parent=1 // pred_region
      %s38 = ssub.s32 512, 512
      %39 = vsyncadd [#allocation6], %s38
      %s40 = sshll.u32 [#allocation7], 4
      %s41 = int_to_ptr.vmem [resolvable:$true] %s40
      %46 = dma.hbm_to_vmem [thread:$0]  %s2, 512, %s41, [#allocation6], 128, 128, 8
    $region13: #{tpu_custom_call.1} parent=1 // pred_fallthru
      _
    // Predicated region
    $region14: #{tpu_custom_call.1} parent=1 // pred_check
      _
    $region15: #{tpu_custom_call.1} parent=1 // pred_check_branch
      %48 = sbr.rel (0) target = $region17
    $region16: #{tpu_custom_call.1} parent=1 // pred_region
      %49 = dma.done [#allocation3], 128
    $region17: #{tpu_custom_call.1} parent=1 // pred_fallthru
      _
    // Predicated region
    $region18: #{tpu_custom_call.1} parent=1 // pred_check
      _
    $region19: #{tpu_custom_call.1} parent=1 // pred_check_branch
      %51 = sbr.rel (0) target = $region21
    $region20: #{tpu_custom_call.1} parent=1 // pred_region
      %52 = dma.done [#allocation6], 2304
    $region21: #{tpu_custom_call.1} parent=1 // pred_fallthru
      _
    // Predicated region
    $region22: #{tpu_custom_call.1} parent=1 // pred_check
      _
    $region23: #{tpu_custom_call.1} parent=1 // pred_check_branch
      %54 = sbr.rel (0) target = $region25
    $region24: #{tpu_custom_call.1} parent=1 // pred_region
      %55 = dma.done [#allocation6], 512
    $region25: #{tpu_custom_call.1} parent=1 // pred_fallthru
      _
    %v56 = vld [vmem:[#allocation5] ss:$0 sm:$0xff]
    %v57 = vld [vmem:[#allocation5 + $0x1] ss:$0 sm:$0xff]
    %v58 = vld [vmem:[#allocation5 + $0x2] ss:$0 sm:$0xff]
    %v59 = vld [vmem:[#allocation5 + $0x3] ss:$0 sm:$0xff]
    %v60 = vld [vmem:[#allocation5 + $0x10] sm:$0xff]
    %v61 = vld [vmem:[#allocation5 + $0x18] sm:$0xff]
    %v62 = vld [vmem:[#allocation5 + $0x20] sm:$0xff]
    %v63 = vld [vmem:[#allocation5 + $0x28] sm:$0xff]
    %v64 = vld [vmem:[#allocation5 + $0x30] sm:$0xff]
    %v65 = vld [vmem:[#allocation5 + $0x38] sm:$0xff]
    %v66 = vld [vmem:[#allocation5 + $0x40] sm:$0xff]
    %v67 = vld [vmem:[#allocation5 + $0x48] sm:$0xff]
    %v68 = vld [vmem:[#allocation5 + $0x50] sm:$0xff]
    %v69 = vld [vmem:[#allocation5 + $0x58] sm:$0xff]
    %v70 = vld [vmem:[#allocation5 + $0x60] sm:$0xff]
    %v71 = vld [vmem:[#allocation5 + $0x68] sm:$0xff]
    %v72 = vld [vmem:[#allocation5 + $0x70] sm:$0xff]
    %v73 = vld [vmem:[#allocation5 + $0x78] sm:$0xff]
    %v74 = vld [vmem:[#allocation5 + $0x80] sm:$0xff]
    %v75 = vld [vmem:[#allocation5 + $0x88] sm:$0xff]
    %v76 = vld [vmem:[#allocation7] sm:$0xff]
    %vm77 = vcmask 261120
    %v79 = vsel %vm77, %v76, 0
    %81 = vmatprep.subr.mxu0 %v61
    %82 = vmatpush1.msra.mxu0 %v60
    %83 = vmatprep.subr.mxu0 %v63
    %84 = vmatpush1.msra.mxu0 %v62
    %85 = vmatprep.subr.mxu0 %v65
    %86 = vmatpush1.msra.mxu0 %v64
    %87 = vmatprep.subr.mxu0 %v67
    %88 = vmatpush1.msra.mxu0 %v66
    %89 = vmatprep.subr.mxu0 0.0
    %90 = vmatpush1.msra.mxu0 0.0
    %91 = vmatprep.subr.mxu0 0.0
    %92 = vmatpush1.msra.mxu0 0.0
    %93 = vmatprep.subr.mxu0 0.0
    %94 = vmatpush1.msra.mxu0 0.0
    %95 = vmatprep.subr.mxu0 0.0
    %96 = vmatpush1.msra.mxu0 0.0
    %97 = vmatprep.subr.mxu0 0.0
    %98 = vmatpush1.msra.mxu0 0.0
    %99 = vmatprep.subr.mxu0 0.0
    %100 = vmatpush1.msra.mxu0 0.0
    %101 = vmatprep.subr.mxu0 0.0
    %102 = vmatpush1.msra.mxu0 0.0
    %103 = vmatprep.subr.mxu0 0.0
    %104 = vmatpush1.msra.mxu0 0.0
    %105 = vmatprep.subr.mxu0 0.0
    %106 = vmatpush1.msra.mxu0 0.0
    %107 = vmatprep.subr.mxu0 0.0
    %108 = vmatpush1.msra.mxu0 0.0
    %109 = vmatprep.subr.mxu0 0.0
    %110 = vmatpush1.msra.mxu0 0.0
    %111 = vmatprep.subr.mxu0 0.0
    %112 = vmatpush1.msra.mxu0 0.0
    %113 = vmatprep.subr.mxu0 0.0
    %114 = vmatpush1.msra.mxu0 0.0
    %115 = vmatprep.subr.mxu0 0.0
    %116 = vmatpush1.msra.mxu0 0.0
    %117 = vmatprep.subr.mxu0 0.0
    %118 = vmatpush1.msra.mxu0 0.0
    %119 = vmatprep.subr.mxu0 0.0
    %120 = vmatpush1.msra.mxu0 0.0
    %121 = vmatprep.subr.mxu0 0.0
    %122 = vmatpush1.msra.mxu0 0.0
    %123 = vmatprep.subr.mxu0 0.0
    %124 = vmatpush1.msra.mxu0 0.0
    %125 = vmatprep.subr.mxu0 0.0
    %126 = vmatpush1.msra.mxu0 0.0
    %127 = vmatprep.subr.mxu0 0.0
    %128 = vmatpush1.msra.mxu0 0.0
    %129 = vmatprep.subr.mxu0 0.0
    %130 = vmatpush1.msra.mxu0 0.0
    %131 = vmatprep.subr.mxu0 0.0
    %132 = vmatpush1.msra.mxu0 0.0
    %133 = vmatprep.subr.mxu0 0.0
    %134 = vmatpush1.msra.mxu0 0.0
    %135 = vmatprep.subr.mxu0 0.0
    %136 = vmatpush1.msra.mxu0 0.0
    %137 = vmatprep.subr.mxu0 0.0
    %138 = vmatpush1.msra.mxu0 0.0
    %139 = vmatprep.subr.mxu0 0.0
    %140 = vmatpush1.msra.mxu0 0.0
    %141 = vmatprep.subr.mxu0 0.0
    %142 = vmatpush1.msra.mxu0 0.0
    %143 = vmatprep.subr.mxu0 0.0
    %144 = vmatpush1.msra.mxu0 0.0
    %145 = vmatprep.mubr.f32.mxu0 0.0
    %146 = vmatmul.mubr.f32.gmra.mrb[0].mxu0 %v79
    %v147 = vpop.f32.mrb[0].mxu0
    %v148 = vpop.f32.mrb[0].mxu0
    %v149 = vadd.f32 0.0, %v148
    %150 = vdwg.mxu0
    %s151 = scalar_lea.vmem [#allocation7], 8
    %v152 = vld [vmem:[%s151] sm:$0xff]
    %v154 = vsel %vm77, %v152, 0
    %156 = vmatprep.subr.mxu0 %v69
    %157 = vmatpush1.msra.mxu0 %v68
    %158 = vmatprep.subr.mxu0 %v71
    %159 = vmatpush1.msra.mxu0 %v70
    %160 = vmatprep.subr.mxu0 %v73
    %161 = vmatpush1.msra.mxu0 %v72
    %162 = vmatprep.subr.mxu0 %v75
    %163 = vmatpush1.msra.mxu0 %v74
    %164 = vmatprep.subr.mxu0 0.0
    %165 = vmatpush1.msra.mxu0 0.0
    %166 = vmatprep.subr.mxu0 0.0
    %167 = vmatpush1.msra.mxu0 0.0
    %168 = vmatprep.subr.mxu0 0.0
    %169 = vmatpush1.msra.mxu0 0.0
    %170 = vmatprep.subr.mxu0 0.0
    %171 = vmatpush1.msra.mxu0 0.0
    %172 = vmatprep.subr.mxu0 0.0
    %173 = vmatpush1.msra.mxu0 0.0
    %174 = vmatprep.subr.mxu0 0.0
    %175 = vmatpush1.msra.mxu0 0.0
    %176 = vmatprep.subr.mxu0 0.0
    %177 = vmatpush1.msra.mxu0 0.0
    %178 = vmatprep.subr.mxu0 0.0
    %179 = vmatpush1.msra.mxu0 0.0
    %180 = vmatprep.subr.mxu0 0.0
    %181 = vmatpush1.msra.mxu0 0.0
    %182 = vmatprep.subr.mxu0 0.0
    %183 = vmatpush1.msra.mxu0 0.0
    %184 = vmatprep.subr.mxu0 0.0
    %185 = vmatpush1.msra.mxu0 0.0
    %186 = vmatprep.subr.mxu0 0.0
    %187 = vmatpush1.msra.mxu0 0.0
    %188 = vmatprep.subr.mxu0 0.0
    %189 = vmatpush1.msra.mxu0 0.0
    %190 = vmatprep.subr.mxu0 0.0
    %191 = vmatpush1.msra.mxu0 0.0
    %192 = vmatprep.subr.mxu0 0.0
    %193 = vmatpush1.msra.mxu0 0.0
    %194 = vmatprep.subr.mxu0 0.0
    %195 = vmatpush1.msra.mxu0 0.0
    %196 = vmatprep.subr.mxu0 0.0
    %197 = vmatpush1.msra.mxu0 0.0
    %198 = vmatprep.subr.mxu0 0.0
    %199 = vmatpush1.msra.mxu0 0.0
    %200 = vmatprep.subr.mxu0 0.0
    %201 = vmatpush1.msra.mxu0 0.0
    %202 = vmatprep.subr.mxu0 0.0
    %203 = vmatpush1.msra.mxu0 0.0
    %204 = vmatprep.subr.mxu0 0.0
    %205 = vmatpush1.msra.mxu0 0.0
    %206 = vmatprep.subr.mxu0 0.0
    %207 = vmatpush1.msra.mxu0 0.0
    %208 = vmatprep.subr.mxu0 0.0
    %209 = vmatpush1.msra.mxu0 0.0
    %210 = vmatprep.subr.mxu0 0.0
    %211 = vmatpush1.msra.mxu0 0.0
    %212 = vmatprep.subr.mxu0 0.0
    %213 = vmatpush1.msra.mxu0 0.0
    %214 = vmatprep.subr.mxu0 0.0
    %215 = vmatpush1.msra.mxu0 0.0
    %216 = vmatprep.subr.mxu0 0.0
    %217 = vmatpush1.msra.mxu0 0.0
    %218 = vmatprep.subr.mxu0 0.0
    %219 = vmatpush1.msra.mxu0 0.0
    %220 = vmatprep.mubr.f32.mxu0 0.0
    %221 = vmatmul.mubr.f32.gmra.mrb[0].mxu0 %v154
    %v222 = vpop.f32.mrb[0].mxu0
    %v223 = vpop.f32.mrb[0].mxu0
    %v224 = vadd.f32 0.0, %v223
    %225 = vdwg.mxu0
    %s226 = scalar_lea.vmem [#allocation7], 16
    %v227 = vld [vmem:[%s226] sm:$0xff]
    %s228 = scalar_lea.vmem [#allocation7], 24
    %v229 = vld [vmem:[%s228] sm:$0xff]
    %v230 = vadd.f32 %v149, %v56
    %v231 = vxor.u32 %v230, 2147483648
    %v232 = vmul.f32 %v231, 1.442695
    %v233 = vpow.pop %v232
    %v234 = vadd.f32 %v233, 1.0
    %v235 = vrcp.pop %v234
    %v236 = vmul.f32 1.0, %v235
    %v237 = vmul.f32 %v236, 2.0
    %v238 = vsub.f32 %v237, 1.0
    %v239 = vmul.f32 %v236, %v227
    %241 = vrot.lane.b32.xlu0 %v238, 96
    %v242 = vpop.permute.xlu0 %241
    %v244 = vmul.f32 %v236, %v242
    %246 = vrot.lane.b32.xlu0 %v244, 96
    %v247 = vpop.permute.xlu0 %246
    %v249 = vadd.f32 %v239, %v247
    %v250 = vtanh.pop %v249
    %252 = vrot.lane.b32.xlu0 %v250, 96
    %v253 = vpop.permute.xlu0 %252
    %v255 = vmul.f32 %v236, %v253
    %257 = vrot.lane.b32.xlu0 %v255, 32
    %v258 = vpop.permute.xlu0 %257
    %v259 = vsel %vm77, %v258, 0
    %261 = vmatprep.subr.mxu0 %v61
    %262 = vmatpush1.msra.mxu0 %v60
    %263 = vmatprep.subr.mxu0 %v63
    %264 = vmatpush1.msra.mxu0 %v62
    %265 = vmatprep.subr.mxu0 %v65
    %266 = vmatpush1.msra.mxu0 %v64
    %267 = vmatprep.subr.mxu0 %v67
    %268 = vmatpush1.msra.mxu0 %v66
    %269 = vmatprep.subr.mxu0 0.0
    %270 = vmatpush1.msra.mxu0 0.0
    %271 = vmatprep.subr.mxu0 0.0
    %272 = vmatpush1.msra.mxu0 0.0
    %273 = vmatprep.subr.mxu0 0.0
    %274 = vmatpush1.msra.mxu0 0.0
    %275 = vmatprep.subr.mxu0 0.0
    %276 = vmatpush1.msra.mxu0 0.0
    %277 = vmatprep.subr.mxu0 0.0
    %278 = vmatpush1.msra.mxu0 0.0
    %279 = vmatprep.subr.mxu0 0.0
    %280 = vmatpush1.msra.mxu0 0.0
    %281 = vmatprep.subr.mxu0 0.0
    %282 = vmatpush1.msra.mxu0 0.0
    %283 = vmatprep.subr.mxu0 0.0
    %284 = vmatpush1.msra.mxu0 0.0
    %285 = vmatprep.subr.mxu0 0.0
    %286 = vmatpush1.msra.mxu0 0.0
    %287 = vmatprep.subr.mxu0 0.0
    %288 = vmatpush1.msra.mxu0 0.0
    %289 = vmatprep.subr.mxu0 0.0
    %290 = vmatpush1.msra.mxu0 0.0
    %291 = vmatprep.subr.mxu0 0.0
    %292 = vmatpush1.msra.mxu0 0.0
    %293 = vmatprep.subr.mxu0 0.0
    %294 = vmatpush1.msra.mxu0 0.0
    %295 = vmatprep.subr.mxu0 0.0
    %296 = vmatpush1.msra.mxu0 0.0
    %297 = vmatprep.subr.mxu0 0.0
    %298 = vmatpush1.msra.mxu0 0.0
    %299 = vmatprep.subr.mxu0 0.0
    %300 = vmatpush1.msra.mxu0 0.0
    %301 = vmatprep.subr.mxu0 0.0
    %302 = vmatpush1.msra.mxu0 0.0
    %303 = vmatprep.subr.mxu0 0.0
    %304 = vmatpush1.msra.mxu0 0.0
    %305 = vmatprep.subr.mxu0 0.0
    %306 = vmatpush1.msra.mxu0 0.0
    %307 = vmatprep.subr.mxu0 0.0
    %308 = vmatpush1.msra.mxu0 0.0
    %309 = vmatprep.subr.mxu0 0.0
    %310 = vmatpush1.msra.mxu0 0.0
    %311 = vmatprep.subr.mxu0 0.0
    %312 = vmatpush1.msra.mxu0 0.0
    %313 = vmatprep.subr.mxu0 0.0
    %314 = vmatpush1.msra.mxu0 0.0
    %315 = vmatprep.subr.mxu0 0.0
    %316 = vmatpush1.msra.mxu0 0.0
    %317 = vmatprep.subr.mxu0 0.0
    %318 = vmatpush1.msra.mxu0 0.0
    %319 = vmatprep.subr.mxu0 0.0
    %320 = vmatpush1.msra.mxu0 0.0
    %321 = vmatprep.subr.mxu0 0.0
    %322 = vmatpush1.msra.mxu0 0.0
    %323 = vmatprep.subr.mxu0 0.0
    %324 = vmatpush1.msra.mxu0 0.0
    %325 = vmatprep.mubr.f32.mxu0 0.0
    %326 = vmatmul.mubr.f32.gmra.mrb[0].mxu0 %v259
    %v327 = vpop.f32.mrb[0].mxu0
    %v328 = vadd.f32 0.0, %v327
    %v329 = vpop.f32.mrb[0].mxu0
    %v330 = vadd.f32 0.0, %v329
    %331 = vdwg.mxu0
    %v332 = vadd.f32 %v328, %v224
    %v333 = vadd.f32 %v332, %v58
    %v334 = vxor.u32 %v333, 2147483648
    %v335 = vmul.f32 %v334, 1.442695
    %v336 = vpow.pop %v335
    %v337 = vadd.f32 %v336, 1.0
    %v338 = vrcp.pop %v337
    %v339 = vmul.f32 1.0, %v338
    %v340 = vmul.f32 %v339, 2.0
    %v341 = vsub.f32 %v340, 1.0
    %v342 = vmul.f32 %v339, %v229
    %344 = vrot.lane.b32.xlu0 %v341, 96
    %v345 = vpop.permute.xlu0 %344
    %v347 = vmul.f32 %v339, %v345
    %349 = vrot.lane.b32.xlu0 %v347, 96
    %v350 = vpop.permute.xlu0 %349
    %v352 = vadd.f32 %v342, %v350
    %v353 = vtanh.pop %v352
    %355 = vrot.lane.b32.xlu0 %v353, 96
    %v356 = vpop.permute.xlu0 %355
    %v358 = vmul.f32 %v339, %v356
    %360 = vrot.lane.b32.xlu0 %v358, 32
    %v361 = vpop.permute.xlu0 %360
    %v362 = vsel %vm77, %v361, 0
    %364 = vmatprep.subr.mxu0 %v69
    %365 = vmatpush1.msra.mxu0 %v68
    %366 = vmatprep.subr.mxu0 %v71
    %367 = vmatpush1.msra.mxu0 %v70
    %368 = vmatprep.subr.mxu0 %v73
    %369 = vmatpush1.msra.mxu0 %v72
    %370 = vmatprep.subr.mxu0 %v75
    %371 = vmatpush1.msra.mxu0 %v74
    %372 = vmatprep.subr.mxu0 0.0
    %373 = vmatpush1.msra.mxu0 0.0
    %374 = vmatprep.subr.mxu0 0.0
    %375 = vmatpush1.msra.mxu0 0.0
    %376 = vmatprep.subr.mxu0 0.0
    %377 = vmatpush1.msra.mxu0 0.0
    %378 = vmatprep.subr.mxu0 0.0
    %379 = vmatpush1.msra.mxu0 0.0
    %380 = vmatprep.subr.mxu0 0.0
    %381 = vmatpush1.msra.mxu0 0.0
    %382 = vmatprep.subr.mxu0 0.0
    %383 = vmatpush1.msra.mxu0 0.0
    %384 = vmatprep.subr.mxu0 0.0
    %385 = vmatpush1.msra.mxu0 0.0
    %386 = vmatprep.subr.mxu0 0.0
    %387 = vmatpush1.msra.mxu0 0.0
    %388 = vmatprep.subr.mxu0 0.0
    %389 = vmatpush1.msra.mxu0 0.0
    %390 = vmatprep.subr.mxu0 0.0
    %391 = vmatpush1.msra.mxu0 0.0
    %392 = vmatprep.subr.mxu0 0.0
    %393 = vmatpush1.msra.mxu0 0.0
    %394 = vmatprep.subr.mxu0 0.0
    %395 = vmatpush1.msra.mxu0 0.0
    %396 = vmatprep.subr.mxu0 0.0
    %397 = vmatpush1.msra.mxu0 0.0
    %398 = vmatprep.subr.mxu0 0.0
    %399 = vmatpush1.msra.mxu0 0.0
    %400 = vmatprep.subr.mxu0 0.0
    %401 = vmatpush1.msra.mxu0 0.0
    %402 = vmatprep.subr.mxu0 0.0
    %403 = vmatpush1.msra.mxu0 0.0
    %404 = vmatprep.subr.mxu0 0.0
    %405 = vmatpush1.msra.mxu0 0.0
    %406 = vmatprep.subr.mxu0 0.0
    %407 = vmatpush1.msra.mxu0 0.0
    %408 = vmatprep.subr.mxu0 0.0
    %409 = vmatpush1.msra.mxu0 0.0
    %410 = vmatprep.subr.mxu0 0.0
    %411 = vmatpush1.msra.mxu0 0.0
    %412 = vmatprep.subr.mxu0 0.0
    %413 = vmatpush1.msra.mxu0 0.0
    %414 = vmatprep.subr.mxu0 0.0
    %415 = vmatpush1.msra.mxu0 0.0
    %416 = vmatprep.subr.mxu0 0.0
    %417 = vmatpush1.msra.mxu0 0.0
    %418 = vmatprep.subr.mxu0 0.0
    %419 = vmatpush1.msra.mxu0 0.0
    %420 = vmatprep.subr.mxu0 0.0
    %421 = vmatpush1.msra.mxu0 0.0
    %422 = vmatprep.subr.mxu0 0.0
    %423 = vmatpush1.msra.mxu0 0.0
    %424 = vmatprep.subr.mxu0 0.0
    %425 = vmatpush1.msra.mxu0 0.0
    %426 = vmatprep.subr.mxu0 0.0
    %427 = vmatpush1.msra.mxu0 0.0
    %428 = vmatprep.mubr.f32.mxu0 0.0
    %429 = vmatmul.mubr.f32.gmra.mrb[0].mxu0 %v362
    %v430 = vpop.f32.mrb[0].mxu0
    %v431 = vadd.f32 0.0, %v430
    %v432 = vpop.f32.mrb[0].mxu0
    %v433 = vadd.f32 0.0, %v432
    %434 = vdwg.mxu0
    %436 = vrot.lane.b32.xlu0 %v59, 96
    %v437 = vpop.permute.xlu0 %436
    %v439 = vmul.f32 %v358, %v437
    %441 = vrot.lane.b32.xlu0 %v439, 32
    %v442 = vpop.permute.xlu0 %441
    %v444 = vsel %vm77, %v442, 0.0
    %445 = vadd.xlane.f32.xlu0 %v444
    %v446 = vpop.xlane.xlu0 %445
    %v447 = vadd.f32 %v330, %v431
    %v448 = vadd.f32 %v447, %v57
    %v449 = vxor.u32 %v448, 2147483648
    %v450 = vmul.f32 %v449, 1.442695
    %v451 = vpow.pop %v450
    %v452 = vadd.f32 %v451, 1.0
    %v453 = vrcp.pop %v452
    %v454 = vmul.f32 1.0, %v453
    %v455 = vmul.f32 %v454, 2.0
    %v456 = vsub.f32 %v455, 1.0
    %v457 = vmul.f32 %v454, %v249
    %459 = vrot.lane.b32.xlu0 %v456, 96
    %v460 = vpop.permute.xlu0 %459
    %v462 = vmul.f32 %v454, %v460
    %464 = vrot.lane.b32.xlu0 %v462, 96
    %v465 = vpop.permute.xlu0 %464
    %v467 = vadd.f32 %v457, %v465
    %v468 = vtanh.pop %v467
    %470 = vrot.lane.b32.xlu0 %v468, 96
    %v471 = vpop.permute.xlu0 %470
    %v473 = vmul.f32 %v454, %v471
    %475 = vrot.lane.b32.xlu0 %v473, 32
    %v476 = vpop.permute.xlu0 %475
    %v477 = vsel %vm77, %v476, 0
    %479 = vmatprep.subr.mxu0 %v61
    %480 = vmatpush1.msra.mxu0 %v60
    %481 = vmatprep.subr.mxu0 %v63
    %482 = vmatpush1.msra.mxu0 %v62
    %483 = vmatprep.subr.mxu0 %v65
    %484 = vmatpush1.msra.mxu0 %v64
    %485 = vmatprep.subr.mxu0 %v67
    %486 = vmatpush1.msra.mxu0 %v66
    %487 = vmatprep.subr.mxu0 0.0
    %488 = vmatpush1.msra.mxu0 0.0
    %489 = vmatprep.subr.mxu0 0.0
    %490 = vmatpush1.msra.mxu0 0.0
    %491 = vmatprep.subr.mxu0 0.0
    %492 = vmatpush1.msra.mxu0 0.0
    %493 = vmatprep.subr.mxu0 0.0
    %494 = vmatpush1.msra.mxu0 0.0
    %495 = vmatprep.subr.mxu0 0.0
    %496 = vmatpush1.msra.mxu0 0.0
    %497 = vmatprep.subr.mxu0 0.0
    %498 = vmatpush1.msra.mxu0 0.0
    %499 = vmatprep.subr.mxu0 0.0
    %500 = vmatpush1.msra.mxu0 0.0
    %501 = vmatprep.subr.mxu0 0.0
    %502 = vmatpush1.msra.mxu0 0.0
    %503 = vmatprep.subr.mxu0 0.0
    %504 = vmatpush1.msra.mxu0 0.0
    %505 = vmatprep.subr.mxu0 0.0
    %506 = vmatpush1.msra.mxu0 0.0
    %507 = vmatprep.subr.mxu0 0.0
    %508 = vmatpush1.msra.mxu0 0.0
    %509 = vmatprep.subr.mxu0 0.0
    %510 = vmatpush1.msra.mxu0 0.0
    %511 = vmatprep.subr.mxu0 0.0
    %512 = vmatpush1.msra.mxu0 0.0
    %513 = vmatprep.subr.mxu0 0.0
    %514 = vmatpush1.msra.mxu0 0.0
    %515 = vmatprep.subr.mxu0 0.0
    %516 = vmatpush1.msra.mxu0 0.0
    %517 = vmatprep.subr.mxu0 0.0
    %518 = vmatpush1.msra.mxu0 0.0
    %519 = vmatprep.subr.mxu0 0.0
    %520 = vmatpush1.msra.mxu0 0.0
    %521 = vmatprep.subr.mxu0 0.0
    %522 = vmatpush1.msra.mxu0 0.0
    %523 = vmatprep.subr.mxu0 0.0
    %524 = vmatpush1.msra.mxu0 0.0
    %525 = vmatprep.subr.mxu0 0.0
    %526 = vmatpush1.msra.mxu0 0.0
    %527 = vmatprep.subr.mxu0 0.0
    %528 = vmatpush1.msra.mxu0 0.0
    %529 = vmatprep.subr.mxu0 0.0
    %530 = vmatpush1.msra.mxu0 0.0
    %531 = vmatprep.subr.mxu0 0.0
    %532 = vmatpush1.msra.mxu0 0.0
    %533 = vmatprep.subr.mxu0 0.0
    %534 = vmatpush1.msra.mxu0 0.0
    %535 = vmatprep.subr.mxu0 0.0
    %536 = vmatpush1.msra.mxu0 0.0
    %537 = vmatprep.subr.mxu0 0.0
    %538 = vmatpush1.msra.mxu0 0.0
    %539 = vmatprep.subr.mxu0 0.0
    %540 = vmatpush1.msra.mxu0 0.0
    %541 = vmatprep.subr.mxu0 0.0
    %542 = vmatpush1.msra.mxu0 0.0
    %543 = vmatprep.mubr.f32.mxu0 0.0
    %544 = vmatmul.mubr.f32.gmra.mrb[0].mxu0 %v477
    %v545 = vpop.f32.mrb[0].mxu0
    %v546 = vadd.f32 0.0, %v545
    %v547 = vpop.f32.mrb[0].mxu0
    %v548 = vadd.f32 0.0, %v547
    %549 = vdwg.mxu0
    %v550 = vadd.f32 %v546, %v433
    %v551 = vadd.f32 %v550, %v58
    %v552 = vxor.u32 %v551, 2147483648
    %v553 = vmul.f32 %v552, 1.442695
    %v554 = vpow.pop %v553
    %v555 = vadd.f32 %v554, 1.0
    %v556 = vrcp.pop %v555
    %v557 = vmul.f32 1.0, %v556
    %v558 = vmul.f32 %v557, 2.0
    %v559 = vsub.f32 %v558, 1.0
    %v560 = vmul.f32 %v557, %v352
    %562 = vrot.lane.b32.xlu0 %v559, 96
    %v563 = vpop.permute.xlu0 %562
    %v565 = vmul.f32 %v557, %v563
    %567 = vrot.lane.b32.xlu0 %v565, 96
    %v568 = vpop.permute.xlu0 %567
    %v570 = vadd.f32 %v560, %v568
    %v571 = vtanh.pop %v570
    %573 = vrot.lane.b32.xlu0 %v571, 96
    %v574 = vpop.permute.xlu0 %573
    %v576 = vmul.f32 %v557, %v574
    %578 = vrot.lane.b32.xlu0 %v576, 32
    %v579 = vpop.permute.xlu0 %578
    %v580 = vsel %vm77, %v579, 0
    %582 = vmatprep.subr.mxu0 %v69
    %583 = vmatpush1.msra.mxu0 %v68
    %584 = vmatprep.subr.mxu0 %v71
    %585 = vmatpush1.msra.mxu0 %v70
    %586 = vmatprep.subr.mxu0 %v73
    %587 = vmatpush1.msra.mxu0 %v72
    %588 = vmatprep.subr.mxu0 %v75
    %589 = vmatpush1.msra.mxu0 %v74
    %590 = vmatprep.subr.mxu0 0.0
    %591 = vmatpush1.msra.mxu0 0.0
    %592 = vmatprep.subr.mxu0 0.0
    %593 = vmatpush1.msra.mxu0 0.0
    %594 = vmatprep.subr.mxu0 0.0
    %595 = vmatpush1.msra.mxu0 0.0
    %596 = vmatprep.subr.mxu0 0.0
    %597 = vmatpush1.msra.mxu0 0.0
    %598 = vmatprep.subr.mxu0 0.0
    %599 = vmatpush1.msra.mxu0 0.0
    %600 = vmatprep.subr.mxu0 0.0
    %601 = vmatpush1.msra.mxu0 0.0
    %602 = vmatprep.subr.mxu0 0.0
    %603 = vmatpush1.msra.mxu0 0.0
    %604 = vmatprep.subr.mxu0 0.0
    %605 = vmatpush1.msra.mxu0 0.0
    %606 = vmatprep.subr.mxu0 0.0
    %607 = vmatpush1.msra.mxu0 0.0
    %608 = vmatprep.subr.mxu0 0.0
    %609 = vmatpush1.msra.mxu0 0.0
    %610 = vmatprep.subr.mxu0 0.0
    %611 = vmatpush1.msra.mxu0 0.0
    %612 = vmatprep.subr.mxu0 0.0
    %613 = vmatpush1.msra.mxu0 0.0
    %614 = vmatprep.subr.mxu0 0.0
    %615 = vmatpush1.msra.mxu0 0.0
    %616 = vmatprep.subr.mxu0 0.0
    %617 = vmatpush1.msra.mxu0 0.0
    %618 = vmatprep.subr.mxu0 0.0
    %619 = vmatpush1.msra.mxu0 0.0
    %620 = vmatprep.subr.mxu0 0.0
    %621 = vmatpush1.msra.mxu0 0.0
    %622 = vmatprep.subr.mxu0 0.0
    %623 = vmatpush1.msra.mxu0 0.0
    %624 = vmatprep.subr.mxu0 0.0
    %625 = vmatpush1.msra.mxu0 0.0
    %626 = vmatprep.subr.mxu0 0.0
    %627 = vmatpush1.msra.mxu0 0.0
    %628 = vmatprep.subr.mxu0 0.0
    %629 = vmatpush1.msra.mxu0 0.0
    %630 = vmatprep.subr.mxu0 0.0
    %631 = vmatpush1.msra.mxu0 0.0
    %632 = vmatprep.subr.mxu0 0.0
    %633 = vmatpush1.msra.mxu0 0.0
    %634 = vmatprep.subr.mxu0 0.0
    %635 = vmatpush1.msra.mxu0 0.0
    %636 = vmatprep.subr.mxu0 0.0
    %637 = vmatpush1.msra.mxu0 0.0
    %638 = vmatprep.subr.mxu0 0.0
    %639 = vmatpush1.msra.mxu0 0.0
    %640 = vmatprep.subr.mxu0 0.0
    %641 = vmatpush1.msra.mxu0 0.0
    %642 = vmatprep.subr.mxu0 0.0
    %643 = vmatpush1.msra.mxu0 0.0
    %644 = vmatprep.subr.mxu0 0.0
    %645 = vmatpush1.msra.mxu0 0.0
    %646 = vmatprep.mubr.f32.mxu0 0.0
    %647 = vmatmul.mubr.f32.gmra.mrb[0].mxu0 %v580
    %v648 = vpop.f32.mrb[0].mxu0
    %v649 = vadd.f32 0.0, %v648
    %v650 = vpop.f32.mrb[0].mxu0
    %v651 = vadd.f32 0.0, %v650
    %652 = vdwg.mxu0
    %v653 = vmul.f32 %v576, %v437
    %655 = vrot.lane.b32.xlu0 %v653, 32
    %v656 = vpop.permute.xlu0 %655
    %v658 = vsel %vm77, %v656, 0.0
    %659 = vadd.xlane.f32.xlu0 %v658
    %v660 = vpop.xlane.xlu0 %659
    %v661 = vadd.f32 %v548, %v649
    %v662 = vadd.f32 %v661, %v57
    %v663 = vxor.u32 %v662, 2147483648
    %v664 = vmul.f32 %v663, 1.442695
    %v665 = vpow.pop %v664
    %v666 = vadd.f32 %v665, 1.0
    %v667 = vrcp.pop %v666
    %v668 = vmul.f32 1.0, %v667
    %v669 = vmul.f32 %v668, 2.0
    %v670 = vsub.f32 %v669, 1.0
    %v671 = vmul.f32 %v668, %v467
    %673 = vrot.lane.b32.xlu0 %v670, 96
    %v674 = vpop.permute.xlu0 %673
    %v676 = vmul.f32 %v668, %v674
    %678 = vrot.lane.b32.xlu0 %v676, 96
    %v679 = vpop.permute.xlu0 %678
    %v681 = vadd.f32 %v671, %v679
    %v682 = vtanh.pop %v681
    %684 = vrot.lane.b32.xlu0 %v682, 96
    %v685 = vpop.permute.xlu0 %684
    %v687 = vmul.f32 %v668, %v685
    %689 = vrot.lane.b32.xlu0 %v687, 32
    %v690 = vpop.permute.xlu0 %689
    %v691 = vsel %vm77, %v690, 0
    %693 = vmatprep.subr.mxu0 %v61
    %694 = vmatpush1.msra.mxu0 %v60
    %695 = vmatprep.subr.mxu0 %v63
    %696 = vmatpush1.msra.mxu0 %v62
    %697 = vmatprep.subr.mxu0 %v65
    %698 = vmatpush1.msra.mxu0 %v64
    %699 = vmatprep.subr.mxu0 %v67
    %700 = vmatpush1.msra.mxu0 %v66
    %701 = vmatprep.subr.mxu0 0.0
    %702 = vmatpush1.msra.mxu0 0.0
    %703 = vmatprep.subr.mxu0 0.0
    %704 = vmatpush1.msra.mxu0 0.0
    %705 = vmatprep.subr.mxu0 0.0
    %706 = vmatpush1.msra.mxu0 0.0
    %707 = vmatprep.subr.mxu0 0.0
    %708 = vmatpush1.msra.mxu0 0.0
    %709 = vmatprep.subr.mxu0 0.0
    %710 = vmatpush1.msra.mxu0 0.0
    %711 = vmatprep.subr.mxu0 0.0
    %712 = vmatpush1.msra.mxu0 0.0
    %713 = vmatprep.subr.mxu0 0.0
    %714 = vmatpush1.msra.mxu0 0.0
    %715 = vmatprep.subr.mxu0 0.0
    %716 = vmatpush1.msra.mxu0 0.0
    %717 = vmatprep.subr.mxu0 0.0
    %718 = vmatpush1.msra.mxu0 0.0
    %719 = vmatprep.subr.mxu0 0.0
    %720 = vmatpush1.msra.mxu0 0.0
    %721 = vmatprep.subr.mxu0 0.0
    %722 = vmatpush1.msra.mxu0 0.0
    %723 = vmatprep.subr.mxu0 0.0
    %724 = vmatpush1.msra.mxu0 0.0
    %725 = vmatprep.subr.mxu0 0.0
    %726 = vmatpush1.msra.mxu0 0.0
    %727 = vmatprep.subr.mxu0 0.0
    %728 = vmatpush1.msra.mxu0 0.0
    %729 = vmatprep.subr.mxu0 0.0
    %730 = vmatpush1.msra.mxu0 0.0
    %731 = vmatprep.subr.mxu0 0.0
    %732 = vmatpush1.msra.mxu0 0.0
    %733 = vmatprep.subr.mxu0 0.0
    %734 = vmatpush1.msra.mxu0 0.0
    %735 = vmatprep.subr.mxu0 0.0
    %736 = vmatpush1.msra.mxu0 0.0
    %737 = vmatprep.subr.mxu0 0.0
    %738 = vmatpush1.msra.mxu0 0.0
    %739 = vmatprep.subr.mxu0 0.0
    %740 = vmatpush1.msra.mxu0 0.0
    %741 = vmatprep.subr.mxu0 0.0
    %742 = vmatpush1.msra.mxu0 0.0
    %743 = vmatprep.subr.mxu0 0.0
    %744 = vmatpush1.msra.mxu0 0.0
    %745 = vmatprep.subr.mxu0 0.0
    %746 = vmatpush1.msra.mxu0 0.0
    %747 = vmatprep.subr.mxu0 0.0
    %748 = vmatpush1.msra.mxu0 0.0
    %749 = vmatprep.subr.mxu0 0.0
    %750 = vmatpush1.msra.mxu0 0.0
    %751 = vmatprep.subr.mxu0 0.0
    %752 = vmatpush1.msra.mxu0 0.0
    %753 = vmatprep.subr.mxu0 0.0
    %754 = vmatpush1.msra.mxu0 0.0
    %755 = vmatprep.subr.mxu0 0.0
    %756 = vmatpush1.msra.mxu0 0.0
    %757 = vmatprep.mubr.f32.mxu0 0.0
    %758 = vmatmul.mubr.f32.gmra.mrb[0].mxu0 %v691
    %v759 = vpop.f32.mrb[0].mxu0
    %v760 = vadd.f32 0.0, %v759
    %v761 = vpop.f32.mrb[0].mxu0
    %v762 = vadd.f32 0.0, %v761
    %763 = vdwg.mxu0
    %v764 = vadd.f32 %v760, %v651
    %v765 = vadd.f32 %v764, %v58
    %v766 = vxor.u32 %v765, 2147483648
    %v767 = vmul.f32 %v766, 1.442695
    %v768 = vpow.pop %v767
    %v769 = vadd.f32 %v768, 1.0
    %v770 = vrcp.pop %v769
    %v771 = vmul.f32 1.0, %v770
    %v772 = vmul.f32 %v771, 2.0
    %v773 = vsub.f32 %v772, 1.0
    %v774 = vmul.f32 %v771, %v570
    %776 = vrot.lane.b32.xlu0 %v773, 96
    %v777 = vpop.permute.xlu0 %776
    %v779 = vmul.f32 %v771, %v777
    %781 = vrot.lane.b32.xlu0 %v779, 96
    %v782 = vpop.permute.xlu0 %781
    %v784 = vadd.f32 %v774, %v782
    %v785 = vtanh.pop %v784
    %787 = vrot.lane.b32.xlu0 %v785, 96
    %v788 = vpop.permute.xlu0 %787
    %v790 = vmul.f32 %v771, %v788
    %792 = vrot.lane.b32.xlu0 %v790, 32
    %v793 = vpop.permute.xlu0 %792
    %v794 = vsel %vm77, %v793, 0
    %796 = vmatprep.subr.mxu0 %v69
    %797 = vmatpush1.msra.mxu0 %v68
    %798 = vmatprep.subr.mxu0 %v71
    %799 = vmatpush1.msra.mxu0 %v70
    %800 = vmatprep.subr.mxu0 %v73
    %801 = vmatpush1.msra.mxu0 %v72
    %802 = vmatprep.subr.mxu0 %v75
    %803 = vmatpush1.msra.mxu0 %v74
    %804 = vmatprep.subr.mxu0 0.0
    %805 = vmatpush1.msra.mxu0 0.0
    %806 = vmatprep.subr.mxu0 0.0
    %807 = vmatpush1.msra.mxu0 0.0
    %808 = vmatprep.subr.mxu0 0.0
    %809 = vmatpush1.msra.mxu0 0.0
    %810 = vmatprep.subr.mxu0 0.0
    %811 = vmatpush1.msra.mxu0 0.0
    %812 = vmatprep.subr.mxu0 0.0
    %813 = vmatpush1.msra.mxu0 0.0
    %814 = vmatprep.subr.mxu0 0.0
    %815 = vmatpush1.msra.mxu0 0.0
    %816 = vmatprep.subr.mxu0 0.0
    %817 = vmatpush1.msra.mxu0 0.0
    %818 = vmatprep.subr.mxu0 0.0
    %819 = vmatpush1.msra.mxu0 0.0
    %820 = vmatprep.subr.mxu0 0.0
    %821 = vmatpush1.msra.mxu0 0.0
    %822 = vmatprep.subr.mxu0 0.0
    %823 = vmatpush1.msra.mxu0 0.0
    %824 = vmatprep.subr.mxu0 0.0
    %825 = vmatpush1.msra.mxu0 0.0
    %826 = vmatprep.subr.mxu0 0.0
    %827 = vmatpush1.msra.mxu0 0.0
    %828 = vmatprep.subr.mxu0 0.0
    %829 = vmatpush1.msra.mxu0 0.0
    %830 = vmatprep.subr.mxu0 0.0
    %831 = vmatpush1.msra.mxu0 0.0
    %832 = vmatprep.subr.mxu0 0.0
    %833 = vmatpush1.msra.mxu0 0.0
    %834 = vmatprep.subr.mxu0 0.0
    %835 = vmatpush1.msra.mxu0 0.0
    %836 = vmatprep.subr.mxu0 0.0
    %837 = vmatpush1.msra.mxu0 0.0
    %838 = vmatprep.subr.mxu0 0.0
    %839 = vmatpush1.msra.mxu0 0.0
    %840 = vmatprep.subr.mxu0 0.0
    %841 = vmatpush1.msra.mxu0 0.0
    %842 = vmatprep.subr.mxu0 0.0
    %843 = vmatpush1.msra.mxu0 0.0
    %844 = vmatprep.subr.mxu0 0.0
    %845 = vmatpush1.msra.mxu0 0.0
    %846 = vmatprep.subr.mxu0 0.0
    %847 = vmatpush1.msra.mxu0 0.0
    %848 = vmatprep.subr.mxu0 0.0
    %849 = vmatpush1.msra.mxu0 0.0
    %850 = vmatprep.subr.mxu0 0.0
    %851 = vmatpush1.msra.mxu0 0.0
    %852 = vmatprep.subr.mxu0 0.0
    %853 = vmatpush1.msra.mxu0 0.0
    %854 = vmatprep.subr.mxu0 0.0
    %855 = vmatpush1.msra.mxu0 0.0
    %856 = vmatprep.subr.mxu0 0.0
    %857 = vmatpush1.msra.mxu0 0.0
    %858 = vmatprep.subr.mxu0 0.0
    %859 = vmatpush1.msra.mxu0 0.0
    %860 = vmatprep.mubr.f32.mxu0 0.0
    %861 = vmatmul.mubr.f32.gmra.mrb[0].mxu0 %v794
    %v862 = vpop.f32.mrb[0].mxu0
    %v863 = vadd.f32 0.0, %v862
    %v864 = vpop.f32.mrb[0].mxu0
    %v865 = vadd.f32 0.0, %v864
    %866 = vdwg.mxu0
    %v867 = vmul.f32 %v790, %v437
    %869 = vrot.lane.b32.xlu0 %v867, 32
    %v870 = vpop.permute.xlu0 %869
    %v872 = vsel %vm77, %v870, 0.0
    %873 = vadd.xlane.f32.xlu0 %v872
    %v874 = vpop.xlane.xlu0 %873
    %v875 = vadd.f32 %v762, %v863
    %v876 = vadd.f32 %v875, %v57
    %v877 = vxor.u32 %v876, 2147483648
    %v878 = vmul.f32 %v877, 1.442695
    %v879 = vpow.pop %v878
    %v880 = vadd.f32 %v879, 1.0
    %v881 = vrcp.pop %v880
    %v882 = vmul.f32 1.0, %v881
    %v883 = vmul.f32 %v882, 2.0
    %v884 = vsub.f32 %v883, 1.0
    %v885 = vmul.f32 %v882, %v681
    %887 = vrot.lane.b32.xlu0 %v884, 96
    %v888 = vpop.permute.xlu0 %887
    %v890 = vmul.f32 %v882, %v888
    %892 = vrot.lane.b32.xlu0 %v890, 96
    %v893 = vpop.permute.xlu0 %892
    %v895 = vadd.f32 %v885, %v893
    %v896 = vtanh.pop %v895
    %898 = vrot.lane.b32.xlu0 %v896, 96
    %v899 = vpop.permute.xlu0 %898
    %v901 = vmul.f32 %v882, %v899
    %903 = vrot.lane.b32.xlu0 %v901, 32
    %v904 = vpop.permute.xlu0 %903
    %v905 = vsel %vm77, %v904, 0
    %907 = vmatprep.subr.mxu0 %v61
    %908 = vmatpush1.msra.mxu0 %v60
    %909 = vmatprep.subr.mxu0 %v63
    %910 = vmatpush1.msra.mxu0 %v62
    %911 = vmatprep.subr.mxu0 %v65
    %912 = vmatpush1.msra.mxu0 %v64
    %913 = vmatprep.subr.mxu0 %v67
    %914 = vmatpush1.msra.mxu0 %v66
    %915 = vmatprep.subr.mxu0 0.0
    %916 = vmatpush1.msra.mxu0 0.0
    %917 = vmatprep.subr.mxu0 0.0
    %918 = vmatpush1.msra.mxu0 0.0
    %919 = vmatprep.subr.mxu0 0.0
    %920 = vmatpush1.msra.mxu0 0.0
    %921 = vmatprep.subr.mxu0 0.0
    %922 = vmatpush1.msra.mxu0 0.0
    %923 = vmatprep.subr.mxu0 0.0
    %924 = vmatpush1.msra.mxu0 0.0
    %925 = vmatprep.subr.mxu0 0.0
    %926 = vmatpush1.msra.mxu0 0.0
    %927 = vmatprep.subr.mxu0 0.0
    %928 = vmatpush1.msra.mxu0 0.0
    %929 = vmatprep.subr.mxu0 0.0
    %930 = vmatpush1.msra.mxu0 0.0
    %931 = vmatprep.subr.mxu0 0.0
    %932 = vmatpush1.msra.mxu0 0.0
    %933 = vmatprep.subr.mxu0 0.0
    %934 = vmatpush1.msra.mxu0 0.0
    %935 = vmatprep.subr.mxu0 0.0
    %936 = vmatpush1.msra.mxu0 0.0
    %937 = vmatprep.subr.mxu0 0.0
    %938 = vmatpush1.msra.mxu0 0.0
    %939 = vmatprep.subr.mxu0 0.0
    %940 = vmatpush1.msra.mxu0 0.0
    %941 = vmatprep.subr.mxu0 0.0
    %942 = vmatpush1.msra.mxu0 0.0
    %943 = vmatprep.subr.mxu0 0.0
    %944 = vmatpush1.msra.mxu0 0.0
    %945 = vmatprep.subr.mxu0 0.0
    %946 = vmatpush1.msra.mxu0 0.0
    %947 = vmatprep.subr.mxu0 0.0
    %948 = vmatpush1.msra.mxu0 0.0
    %949 = vmatprep.subr.mxu0 0.0
    %950 = vmatpush1.msra.mxu0 0.0
    %951 = vmatprep.subr.mxu0 0.0
    %952 = vmatpush1.msra.mxu0 0.0
    %953 = vmatprep.subr.mxu0 0.0
    %954 = vmatpush1.msra.mxu0 0.0
    %955 = vmatprep.subr.mxu0 0.0
    %956 = vmatpush1.msra.mxu0 0.0
    %957 = vmatprep.subr.mxu0 0.0
    %958 = vmatpush1.msra.mxu0 0.0
    %959 = vmatprep.subr.mxu0 0.0
    %960 = vmatpush1.msra.mxu0 0.0
    %961 = vmatprep.subr.mxu0 0.0
    %962 = vmatpush1.msra.mxu0 0.0
    %963 = vmatprep.subr.mxu0 0.0
    %964 = vmatpush1.msra.mxu0 0.0
    %965 = vmatprep.subr.mxu0 0.0
    %966 = vmatpush1.msra.mxu0 0.0
    %967 = vmatprep.subr.mxu0 0.0
    %968 = vmatpush1.msra.mxu0 0.0
    %969 = vmatprep.subr.mxu0 0.0
    %970 = vmatpush1.msra.mxu0 0.0
    %971 = vmatprep.mubr.f32.mxu0 0.0
    %972 = vmatmul.mubr.f32.gmra.mrb[0].mxu0 %v905
    %v973 = vpop.f32.mrb[0].mxu0
    %v974 = vadd.f32 0.0, %v973
    %v975 = vpop.f32.mrb[0].mxu0
    %v976 = vadd.f32 0.0, %v975
    %977 = vdwg.mxu0
    %v978 = vadd.f32 %v974, %v865
    %v979 = vadd.f32 %v978, %v58
    %v980 = vxor.u32 %v979, 2147483648
    %v981 = vmul.f32 %v980, 1.442695
    %v982 = vpow.pop %v981
    %v983 = vadd.f32 %v982, 1.0
    %v984 = vrcp.pop %v983
    %v985 = vmul.f32 1.0, %v984
    %v986 = vmul.f32 %v985, 2.0
    %v987 = vsub.f32 %v986, 1.0
    %v988 = vmul.f32 %v985, %v784
    %990 = vrot.lane.b32.xlu0 %v987, 96
    %v991 = vpop.permute.xlu0 %990
    %v993 = vmul.f32 %v985, %v991
    %995 = vrot.lane.b32.xlu0 %v993, 96
    %v996 = vpop.permute.xlu0 %995
    %v998 = vadd.f32 %v988, %v996
    %v999 = vtanh.pop %v998
    %1001 = vrot.lane.b32.xlu0 %v999, 96
    %v1002 = vpop.permute.xlu0 %1001
    %v1004 = vmul.f32 %v985, %v1002
    %1006 = vrot.lane.b32.xlu0 %v1004, 32
    %v1007 = vpop.permute.xlu0 %1006
    %v1008 = vsel %vm77, %v1007, 0
    %1010 = vmatprep.subr.mxu0 %v69
    %1011 = vmatpush1.msra.mxu0 %v68
    %1012 = vmatprep.subr.mxu0 %v71
    %1013 = vmatpush1.msra.mxu0 %v70
    %1014 = vmatprep.subr.mxu0 %v73
    %1015 = vmatpush1.msra.mxu0 %v72
    %1016 = vmatprep.subr.mxu0 %v75
    %1017 = vmatpush1.msra.mxu0 %v74
    %1018 = vmatprep.subr.mxu0 0.0
    %1019 = vmatpush1.msra.mxu0 0.0
    %1020 = vmatprep.subr.mxu0 0.0
    %1021 = vmatpush1.msra.mxu0 0.0
    %1022 = vmatprep.subr.mxu0 0.0
    %1023 = vmatpush1.msra.mxu0 0.0
    %1024 = vmatprep.subr.mxu0 0.0
    %1025 = vmatpush1.msra.mxu0 0.0
    %1026 = vmatprep.subr.mxu0 0.0
    %1027 = vmatpush1.msra.mxu0 0.0
    %1028 = vmatprep.subr.mxu0 0.0
    %1029 = vmatpush1.msra.mxu0 0.0
    %1030 = vmatprep.subr.mxu0 0.0
    %1031 = vmatpush1.msra.mxu0 0.0
    %1032 = vmatprep.subr.mxu0 0.0
    %1033 = vmatpush1.msra.mxu0 0.0
    %1034 = vmatprep.subr.mxu0 0.0
    %1035 = vmatpush1.msra.mxu0 0.0
    %1036 = vmatprep.subr.mxu0 0.0
    %1037 = vmatpush1.msra.mxu0 0.0
    %1038 = vmatprep.subr.mxu0 0.0
    %1039 = vmatpush1.msra.mxu0 0.0
    %1040 = vmatprep.subr.mxu0 0.0
    %1041 = vmatpush1.msra.mxu0 0.0
    %1042 = vmatprep.subr.mxu0 0.0
    %1043 = vmatpush1.msra.mxu0 0.0
    %1044 = vmatprep.subr.mxu0 0.0
    %1045 = vmatpush1.msra.mxu0 0.0
    %1046 = vmatprep.subr.mxu0 0.0
    %1047 = vmatpush1.msra.mxu0 0.0
    %1048 = vmatprep.subr.mxu0 0.0
    %1049 = vmatpush1.msra.mxu0 0.0
    %1050 = vmatprep.subr.mxu0 0.0
    %1051 = vmatpush1.msra.mxu0 0.0
    %1052 = vmatprep.subr.mxu0 0.0
    %1053 = vmatpush1.msra.mxu0 0.0
    %1054 = vmatprep.subr.mxu0 0.0
    %1055 = vmatpush1.msra.mxu0 0.0
    %1056 = vmatprep.subr.mxu0 0.0
    %1057 = vmatpush1.msra.mxu0 0.0
    %1058 = vmatprep.subr.mxu0 0.0
    %1059 = vmatpush1.msra.mxu0 0.0
    %1060 = vmatprep.subr.mxu0 0.0
    %1061 = vmatpush1.msra.mxu0 0.0
    %1062 = vmatprep.subr.mxu0 0.0
    %1063 = vmatpush1.msra.mxu0 0.0
    %1064 = vmatprep.subr.mxu0 0.0
    %1065 = vmatpush1.msra.mxu0 0.0
    %1066 = vmatprep.subr.mxu0 0.0
    %1067 = vmatpush1.msra.mxu0 0.0
    %1068 = vmatprep.subr.mxu0 0.0
    %1069 = vmatpush1.msra.mxu0 0.0
    %1070 = vmatprep.subr.mxu0 0.0
    %1071 = vmatpush1.msra.mxu0 0.0
    %1072 = vmatprep.subr.mxu0 0.0
    %1073 = vmatpush1.msra.mxu0 0.0
    %1074 = vmatprep.mubr.f32.mxu0 0.0
    %1075 = vmatmul.mubr.f32.gmra.mrb[0].mxu0 %v1008
    %v1076 = vpop.f32.mrb[0].mxu0
    %v1077 = vadd.f32 0.0, %v1076
    %v1078 = vpop.f32.mrb[0].mxu0
    %v1079 = vadd.f32 0.0, %v1078
    %1080 = vdwg.mxu0
    %v1081 = vmul.f32 %v1004, %v437
    %1083 = vrot.lane.b32.xlu0 %v1081, 32
    %v1084 = vpop.permute.xlu0 %1083
    %v1086 = vsel %vm77, %v1084, 0.0
    %1087 = vadd.xlane.f32.xlu0 %v1086
    %v1088 = vpop.xlane.xlu0 %1087
    %v1089 = vadd.f32 %v976, %v1077
    %v1090 = vadd.f32 %v1089, %v57
    %v1091 = vxor.u32 %v1090, 2147483648
    %v1092 = vmul.f32 %v1091, 1.442695
    %v1093 = vpow.pop %v1092
    %v1094 = vadd.f32 %v1093, 1.0
    %v1095 = vrcp.pop %v1094
    %v1096 = vmul.f32 1.0, %v1095
    %v1097 = vmul.f32 %v1096, 2.0
    %v1098 = vsub.f32 %v1097, 1.0
    %v1099 = vmul.f32 %v1096, %v895
    %1101 = vrot.lane.b32.xlu0 %v1098, 96
    %v1102 = vpop.permute.xlu0 %1101
    %v1104 = vmul.f32 %v1096, %v1102
    %1106 = vrot.lane.b32.xlu0 %v1104, 96
    %v1107 = vpop.permute.xlu0 %1106
    %v1109 = vadd.f32 %v1099, %v1107
    %v1110 = vtanh.pop %v1109
    %1112 = vrot.lane.b32.xlu0 %v1110, 96
    %v1113 = vpop.permute.xlu0 %1112
    %v1115 = vmul.f32 %v1096, %v1113
    %1117 = vrot.lane.b32.xlu0 %v1115, 32
    %v1118 = vpop.permute.xlu0 %1117
    %v1119 = vsel %vm77, %v1118, 0
    %1121 = vmatprep.subr.mxu0 %v61
    %1122 = vmatpush1.msra.mxu0 %v60
    %1123 = vmatprep.subr.mxu0 %v63
    %1124 = vmatpush1.msra.mxu0 %v62
    %1125 = vmatprep.subr.mxu0 %v65
    %1126 = vmatpush1.msra.mxu0 %v64
    %1127 = vmatprep.subr.mxu0 %v67
    %1128 = vmatpush1.msra.mxu0 %v66
    %1129 = vmatprep.subr.mxu0 0.0
    %1130 = vmatpush1.msra.mxu0 0.0
    %1131 = vmatprep.subr.mxu0 0.0
    %1132 = vmatpush1.msra.mxu0 0.0
    %1133 = vmatprep.subr.mxu0 0.0
    %1134 = vmatpush1.msra.mxu0 0.0
    %1135 = vmatprep.subr.mxu0 0.0
    %1136 = vmatpush1.msra.mxu0 0.0
    %1137 = vmatprep.subr.mxu0 0.0
    %1138 = vmatpush1.msra.mxu0 0.0
    %1139 = vmatprep.subr.mxu0 0.0
    %1140 = vmatpush1.msra.mxu0 0.0
    %1141 = vmatprep.subr.mxu0 0.0
    %1142 = vmatpush1.msra.mxu0 0.0
    %1143 = vmatprep.subr.mxu0 0.0
    %1144 = vmatpush1.msra.mxu0 0.0
    %1145 = vmatprep.subr.mxu0 0.0
    %1146 = vmatpush1.msra.mxu0 0.0
    %1147 = vmatprep.subr.mxu0 0.0
    %1148 = vmatpush1.msra.mxu0 0.0
    %1149 = vmatprep.subr.mxu0 0.0
    %1150 = vmatpush1.msra.mxu0 0.0
    %1151 = vmatprep.subr.mxu0 0.0
    %1152 = vmatpush1.msra.mxu0 0.0
    %1153 = vmatprep.subr.mxu0 0.0
    %1154 = vmatpush1.msra.mxu0 0.0
    %1155 = vmatprep.subr.mxu0 0.0
    %1156 = vmatpush1.msra.mxu0 0.0
    %1157 = vmatprep.subr.mxu0 0.0
    %1158 = vmatpush1.msra.mxu0 0.0
    %1159 = vmatprep.subr.mxu0 0.0
    %1160 = vmatpush1.msra.mxu0 0.0
    %1161 = vmatprep.subr.mxu0 0.0
    %1162 = vmatpush1.msra.mxu0 0.0
    %1163 = vmatprep.subr.mxu0 0.0
    %1164 = vmatpush1.msra.mxu0 0.0
    %1165 = vmatprep.subr.mxu0 0.0
    %1166 = vmatpush1.msra.mxu0 0.0
    %1167 = vmatprep.subr.mxu0 0.0
    %1168 = vmatpush1.msra.mxu0 0.0
    %1169 = vmatprep.subr.mxu0 0.0
    %1170 = vmatpush1.msra.mxu0 0.0
    %1171 = vmatprep.subr.mxu0 0.0
    %1172 = vmatpush1.msra.mxu0 0.0
    %1173 = vmatprep.subr.mxu0 0.0
    %1174 = vmatpush1.msra.mxu0 0.0
    %1175 = vmatprep.subr.mxu0 0.0
    %1176 = vmatpush1.msra.mxu0 0.0
    %1177 = vmatprep.subr.mxu0 0.0
    %1178 = vmatpush1.msra.mxu0 0.0
    %1179 = vmatprep.subr.mxu0 0.0
    %1180 = vmatpush1.msra.mxu0 0.0
    %1181 = vmatprep.subr.mxu0 0.0
    %1182 = vmatpush1.msra.mxu0 0.0
    %1183 = vmatprep.subr.mxu0 0.0
    %1184 = vmatpush1.msra.mxu0 0.0
    %1185 = vmatprep.mubr.f32.mxu0 0.0
    %1186 = vmatmul.mubr.f32.gmra.mrb[0].mxu0 %v1119
    %v1187 = vpop.f32.mrb[0].mxu0
    %v1188 = vadd.f32 0.0, %v1187
    %v1189 = vpop.f32.mrb[0].mxu0
    %v1190 = vadd.f32 0.0, %v1189
    %1191 = vdwg.mxu0
    %v1192 = vadd.f32 %v1188, %v1079
    %v1193 = vadd.f32 %v1192, %v58
    %v1194 = vxor.u32 %v1193, 2147483648
    %v1195 = vmul.f32 %v1194, 1.442695
    %v1196 = vpow.pop %v1195
    %v1197 = vadd.f32 %v1196, 1.0
    %v1198 = vrcp.pop %v1197
    %v1199 = vmul.f32 1.0, %v1198
    %v1200 = vmul.f32 %v1199, 2.0
    %v1201 = vsub.f32 %v1200, 1.0
    %v1202 = vmul.f32 %v1199, %v998
    %1204 = vrot.lane.b32.xlu0 %v1201, 96
    %v1205 = vpop.permute.xlu0 %1204
    %v1207 = vmul.f32 %v1199, %v1205
    %1209 = vrot.lane.b32.xlu0 %v1207, 96
    %v1210 = vpop.permute.xlu0 %1209
    %v1212 = vadd.f32 %v1202, %v1210
    %v1213 = vtanh.pop %v1212
    %1215 = vrot.lane.b32.xlu0 %v1213, 96
    %v1216 = vpop.permute.xlu0 %1215
    %v1218 = vmul.f32 %v1199, %v1216
    %1220 = vrot.lane.b32.xlu0 %v1218, 32
    %v1221 = vpop.permute.xlu0 %1220
    %v1222 = vsel %vm77, %v1221, 0
    %1224 = vmatprep.subr.mxu0 %v69
    %1225 = vmatpush1.msra.mxu0 %v68
    %1226 = vmatprep.subr.mxu0 %v71
    %1227 = vmatpush1.msra.mxu0 %v70
    %1228 = vmatprep.subr.mxu0 %v73
    %1229 = vmatpush1.msra.mxu0 %v72
    %1230 = vmatprep.subr.mxu0 %v75
    %1231 = vmatpush1.msra.mxu0 %v74
    %1232 = vmatprep.subr.mxu0 0.0
    %1233 = vmatpush1.msra.mxu0 0.0
    %1234 = vmatprep.subr.mxu0 0.0
    %1235 = vmatpush1.msra.mxu0 0.0
    %1236 = vmatprep.subr.mxu0 0.0
    %1237 = vmatpush1.msra.mxu0 0.0
    %1238 = vmatprep.subr.mxu0 0.0
    %1239 = vmatpush1.msra.mxu0 0.0
    %1240 = vmatprep.subr.mxu0 0.0
    %1241 = vmatpush1.msra.mxu0 0.0
    %1242 = vmatprep.subr.mxu0 0.0
    %1243 = vmatpush1.msra.mxu0 0.0
    %1244 = vmatprep.subr.mxu0 0.0
    %1245 = vmatpush1.msra.mxu0 0.0
    %1246 = vmatprep.subr.mxu0 0.0
    %1247 = vmatpush1.msra.mxu0 0.0
    %1248 = vmatprep.subr.mxu0 0.0
    %1249 = vmatpush1.msra.mxu0 0.0
    %1250 = vmatprep.subr.mxu0 0.0
    %1251 = vmatpush1.msra.mxu0 0.0
    %1252 = vmatprep.subr.mxu0 0.0
    %1253 = vmatpush1.msra.mxu0 0.0
    %1254 = vmatprep.subr.mxu0 0.0
    %1255 = vmatpush1.msra.mxu0 0.0
    %1256 = vmatprep.subr.mxu0 0.0
    %1257 = vmatpush1.msra.mxu0 0.0
    %1258 = vmatprep.subr.mxu0 0.0
    %1259 = vmatpush1.msra.mxu0 0.0
    %1260 = vmatprep.subr.mxu0 0.0
    %1261 = vmatpush1.msra.mxu0 0.0
    %1262 = vmatprep.subr.mxu0 0.0
    %1263 = vmatpush1.msra.mxu0 0.0
    %1264 = vmatprep.subr.mxu0 0.0
    %1265 = vmatpush1.msra.mxu0 0.0
    %1266 = vmatprep.subr.mxu0 0.0
    %1267 = vmatpush1.msra.mxu0 0.0
    %1268 = vmatprep.subr.mxu0 0.0
    %1269 = vmatpush1.msra.mxu0 0.0
    %1270 = vmatprep.subr.mxu0 0.0
    %1271 = vmatpush1.msra.mxu0 0.0
    %1272 = vmatprep.subr.mxu0 0.0
    %1273 = vmatpush1.msra.mxu0 0.0
    %1274 = vmatprep.subr.mxu0 0.0
    %1275 = vmatpush1.msra.mxu0 0.0
    %1276 = vmatprep.subr.mxu0 0.0
    %1277 = vmatpush1.msra.mxu0 0.0
    %1278 = vmatprep.subr.mxu0 0.0
    %1279 = vmatpush1.msra.mxu0 0.0
    %1280 = vmatprep.subr.mxu0 0.0
    %1281 = vmatpush1.msra.mxu0 0.0
    %1282 = vmatprep.subr.mxu0 0.0
    %1283 = vmatpush1.msra.mxu0 0.0
    %1284 = vmatprep.subr.mxu0 0.0
    %1285 = vmatpush1.msra.mxu0 0.0
    %1286 = vmatprep.subr.mxu0 0.0
    %1287 = vmatpush1.msra.mxu0 0.0
    %1288 = vmatprep.mubr.f32.mxu0 0.0
    %1289 = vmatmul.mubr.f32.gmra.mrb[0].mxu0 %v1222
    %v1290 = vpop.f32.mrb[0].mxu0
    %v1291 = vadd.f32 0.0, %v1290
    %v1292 = vpop.f32.mrb[0].mxu0
    %v1293 = vadd.f32 0.0, %v1292
    %1294 = vdwg.mxu0
    %v1295 = vmul.f32 %v1218, %v437
    %1297 = vrot.lane.b32.xlu0 %v1295, 32
    %v1298 = vpop.permute.xlu0 %1297
    %v1300 = vsel %vm77, %v1298, 0.0
    %1301 = vadd.xlane.f32.xlu0 %v1300
    %v1302 = vpop.xlane.xlu0 %1301
    %v1303 = vadd.f32 %v1190, %v1291
    %v1304 = vadd.f32 %v1303, %v57
    %v1305 = vxor.u32 %v1304, 2147483648
    %v1306 = vmul.f32 %v1305, 1.442695
    %v1307 = vpow.pop %v1306
    %v1308 = vadd.f32 %v1307, 1.0
    %v1309 = vrcp.pop %v1308
    %v1310 = vmul.f32 1.0, %v1309
    %v1311 = vmul.f32 %v1310, 2.0
    %v1312 = vsub.f32 %v1311, 1.0
    %v1313 = vmul.f32 %v1310, %v1109
    %1315 = vrot.lane.b32.xlu0 %v1312, 96
    %v1316 = vpop.permute.xlu0 %1315
    %v1318 = vmul.f32 %v1310, %v1316
    %1320 = vrot.lane.b32.xlu0 %v1318, 96
    %v1321 = vpop.permute.xlu0 %1320
    %v1323 = vadd.f32 %v1313, %v1321
    %v1324 = vtanh.pop %v1323
    %1326 = vrot.lane.b32.xlu0 %v1324, 96
    %v1327 = vpop.permute.xlu0 %1326
    %v1329 = vmul.f32 %v1310, %v1327
    %1331 = vrot.lane.b32.xlu0 %v1329, 32
    %v1332 = vpop.permute.xlu0 %1331
    %v1333 = vsel %vm77, %v1332, 0
    %1335 = vmatprep.subr.mxu0 %v61
    %1336 = vmatpush1.msra.mxu0 %v60
    %1337 = vmatprep.subr.mxu0 %v63
    %1338 = vmatpush1.msra.mxu0 %v62
    %1339 = vmatprep.subr.mxu0 %v65
    %1340 = vmatpush1.msra.mxu0 %v64
    %1341 = vmatprep.subr.mxu0 %v67
    %1342 = vmatpush1.msra.mxu0 %v66
    %1343 = vmatprep.subr.mxu0 0.0
    %1344 = vmatpush1.msra.mxu0 0.0
    %1345 = vmatprep.subr.mxu0 0.0
    %1346 = vmatpush1.msra.mxu0 0.0
    %1347 = vmatprep.subr.mxu0 0.0
    %1348 = vmatpush1.msra.mxu0 0.0
    %1349 = vmatprep.subr.mxu0 0.0
    %1350 = vmatpush1.msra.mxu0 0.0
    %1351 = vmatprep.subr.mxu0 0.0
    %1352 = vmatpush1.msra.mxu0 0.0
    %1353 = vmatprep.subr.mxu0 0.0
    %1354 = vmatpush1.msra.mxu0 0.0
    %1355 = vmatprep.subr.mxu0 0.0
    %1356 = vmatpush1.msra.mxu0 0.0
    %1357 = vmatprep.subr.mxu0 0.0
    %1358 = vmatpush1.msra.mxu0 0.0
    %1359 = vmatprep.subr.mxu0 0.0
    %1360 = vmatpush1.msra.mxu0 0.0
    %1361 = vmatprep.subr.mxu0 0.0
    %1362 = vmatpush1.msra.mxu0 0.0
    %1363 = vmatprep.subr.mxu0 0.0
    %1364 = vmatpush1.msra.mxu0 0.0
    %1365 = vmatprep.subr.mxu0 0.0
    %1366 = vmatpush1.msra.mxu0 0.0
    %1367 = vmatprep.subr.mxu0 0.0
    %1368 = vmatpush1.msra.mxu0 0.0
    %1369 = vmatprep.subr.mxu0 0.0
    %1370 = vmatpush1.msra.mxu0 0.0
    %1371 = vmatprep.subr.mxu0 0.0
    %1372 = vmatpush1.msra.mxu0 0.0
    %1373 = vmatprep.subr.mxu0 0.0
    %1374 = vmatpush1.msra.mxu0 0.0
    %1375 = vmatprep.subr.mxu0 0.0
    %1376 = vmatpush1.msra.mxu0 0.0
    %1377 = vmatprep.subr.mxu0 0.0
    %1378 = vmatpush1.msra.mxu0 0.0
    %1379 = vmatprep.subr.mxu0 0.0
    %1380 = vmatpush1.msra.mxu0 0.0
    %1381 = vmatprep.subr.mxu0 0.0
    %1382 = vmatpush1.msra.mxu0 0.0
    %1383 = vmatprep.subr.mxu0 0.0
    %1384 = vmatpush1.msra.mxu0 0.0
    %1385 = vmatprep.subr.mxu0 0.0
    %1386 = vmatpush1.msra.mxu0 0.0
    %1387 = vmatprep.subr.mxu0 0.0
    %1388 = vmatpush1.msra.mxu0 0.0
    %1389 = vmatprep.subr.mxu0 0.0
    %1390 = vmatpush1.msra.mxu0 0.0
    %1391 = vmatprep.subr.mxu0 0.0
    %1392 = vmatpush1.msra.mxu0 0.0
    %1393 = vmatprep.subr.mxu0 0.0
    %1394 = vmatpush1.msra.mxu0 0.0
    %1395 = vmatprep.subr.mxu0 0.0
    %1396 = vmatpush1.msra.mxu0 0.0
    %1397 = vmatprep.subr.mxu0 0.0
    %1398 = vmatpush1.msra.mxu0 0.0
    %1399 = vmatprep.mubr.f32.mxu0 0.0
    %1400 = vmatmul.mubr.f32.gmra.mrb[0].mxu0 %v1333
    %v1401 = vpop.f32.mrb[0].mxu0
    %v1402 = vadd.f32 0.0, %v1401
    %v1403 = vpop.f32.mrb[0].mxu0
    %1404 = vdwg.mxu0
    %v1405 = vadd.f32 %v1402, %v1293
    %v1406 = vadd.f32 %v1405, %v58
    %v1407 = vxor.u32 %v1406, 2147483648
    %v1408 = vmul.f32 %v1407, 1.442695
    %v1409 = vpow.pop %v1408
    %v1410 = vadd.f32 %v1409, 1.0
    %v1411 = vrcp.pop %v1410
    %v1412 = vmul.f32 1.0, %v1411
    %v1413 = vmul.f32 %v1412, 2.0
    %v1414 = vsub.f32 %v1413, 1.0
    %v1415 = vmul.f32 %v1412, %v1212
    %1417 = vrot.lane.b32.xlu0 %v1414, 96
    %v1418 = vpop.permute.xlu0 %1417
    %v1420 = vmul.f32 %v1412, %v1418
    %1422 = vrot.lane.b32.xlu0 %v1420, 96
    %v1423 = vpop.permute.xlu0 %1422
    %v1425 = vadd.f32 %v1415, %v1423
    %v1426 = vtanh.pop %v1425
    %1428 = vrot.lane.b32.xlu0 %v1426, 96
    %v1429 = vpop.permute.xlu0 %1428
    %v1431 = vmul.f32 %v1412, %v1429
    %v1432 = vmul.f32 %v1431, %v437
    %1434 = vrot.lane.b32.xlu0 %v1432, 32
    %v1435 = vpop.permute.xlu0 %1434
    %v1437 = vsel %vm77, %v1435, 0.0
    %1438 = vadd.xlane.f32.xlu0 %v1437
    %v1439 = vpop.xlane.xlu0 %1438
    %vm1440 = vcmask 7168
    %v1441 = vsel %vm1440, %v446, %v660
    %vm1442 = vcmask 15360
    %v1443 = vsel %vm1442, %v1441, %v874
    %vm1444 = vcmask 23552
    %v1445 = vsel %vm1444, %v1443, %v1088
    %vm1446 = vcmask 31744
    %v1447 = vsel %vm1446, %v1445, %v1302
    %vm1448 = vcmask 39936
    %v1449 = vsel %vm1448, %v1447, %v1439
    %v1450 = vld [vmem:[#allocation2] sm:$0xff]
    %v1451 = vsub.f32 %v1449, %v1450
    %v1452 = vmul.f32 %v1451, %v1451
    %vm1453 = vcmask 48128
    %v1454 = vsel %vm1453, %v1452, 0.0
    %1455 = vadd.xlane.f32.xlu0 %v1454
    %v1456 = vpop.xlane.xlu0 %1455
    %v1457 = vrot.slane %v1456, 4
    %v1458 = vadd.f32 %v1456, %v1457
    %v1459 = vrot.slane %v1458, 2
    %v1460 = vadd.f32 %v1458, %v1459
    %v1461 = vrot.slane %v1460, 1
    %v1462 = vadd.f32 %v1460, %v1461
    %s1463 = vtos %v1462
    %v1464 = vstv %s1463
    %v1465 = vmul.f32 %v1464, 0.125
    %vm1466 = vcmask 0
    %1467 = vst.msk [vmem:[#allocation8] sm:$0x1] %vm1466, %v1465
    %1468 = vst.msk [vmem:[%s4] sm:$0xff] %vm1440, %v1439
    // Predicated region
    $region26: #{tpu_custom_call.1} parent=1 // pred_check
      _
    $region27: #{tpu_custom_call.1} parent=1 // pred_check_branch
      %1470 = sbr.rel (0) target = $region29
    $region28: #{tpu_custom_call.1} parent=1 // pred_region
      %s1472 = ssub.s32 16, 16
      %1473 = vsyncadd [#allocation4], %s1472
      %s1475 = sshll.u32 [#allocation8], 4
      %s1476 = int_to_ptr.vmem [resolvable:$true] %s1475
      %1478 = dma.vmem_to_hbm [thread:$0]  %s1476, 16, %s3, [#allocation4]
    $region29: #{tpu_custom_call.1} parent=1 // pred_fallthru
      _
    // Predicated region
    $region30: #{tpu_custom_call.1} parent=1 // pred_check
      _
    $region31: #{tpu_custom_call.1} parent=1 // pred_check_branch
      %1480 = sbr.rel (0) target = $region33
    $region32: #{tpu_custom_call.1} parent=1 // pred_region
      _
    $region33: #{tpu_custom_call.1} parent=1 // pred_fallthru
      _
    // Predicated region
    $region34: #{tpu_custom_call.1} parent=1 // pred_check
      _
    $region35: #{tpu_custom_call.1} parent=1 // pred_check_branch
      %1482 = sbr.rel (0) target = $region37
    $region36: #{tpu_custom_call.1} parent=1 // pred_region
      %1483 = dma.done [#allocation4], 16
    $region37: #{tpu_custom_call.1} parent=1 // pred_fallthru
      _
    // Predicated region
    $region38: #{tpu_custom_call.1} parent=1 // pred_check
      _
    $region39: #{tpu_custom_call.1} parent=1 // pred_check_branch
      %1485 = sbr.rel (0) target = $region41
    $region40: #{tpu_custom_call.1} parent=1 // pred_region
      _
    $region41: #{tpu_custom_call.1} parent=1 // pred_fallthru
      _
    %1486 = vsyncpa [#allocation3], 1
    %1487 = vsyncpa [#allocation6], 1
    %1488 = vsyncpa [#allocation4], 1

</llo_original>
